<compile_context>
chip_gen: v7x
topology: tpu7x:2x2x1
jax: 0.10.0
libtpu: 0.0.40
codegen_flags: <defaults>
</compile_context>

<pallas_src>
import functools

import jax
import jax.numpy as jnp
import numpy as np
from jax.experimental import pallas as pl
from jax.experimental.pallas import tpu as pltpu


# ----------------------------------------------------------------------------
# Pallas kernel: a chain of small MXU matmuls on lane-dense (rows, W*C) tiles.
# No scratch, no padding buffer, no unaligned slicing.
# ----------------------------------------------------------------------------
def _inception_kernel(x_ref,                   # (1, bb*H, W*Cin)
                      a1_ref, b1_ref,          # conv1(1x1)+bn1: (W*Cin, W*P), (1, W*P)
                      r_ref, b2_ref,           # conv2(3x3)+bn2: (3, W*P, W*P), (1, W*P)
                      l_ref, sel_ref,          # row taps / crop: (3, bb*Hc, bb*H), (bb*Hc, bb*H)
                      w3_ref, w4_ref, bc_ref,  # conv3+bn3 | conv1x1+bn1x1 (+concat+crop)
                      out_ref,                 # (1, bb*Hc, Wc*5P)
                      *, last_relu):
    f32 = jnp.float32
    x = x_ref[0].astype(f32)                                   # (bb*H, W*Cin)

    # branch3x3 / conv1: 1x1 conv + bn1 + relu  (block-diagonal matmul)
    t = jnp.dot(x, a1_ref[...], preferred_element_type=f32) + b1_ref[...]
    t = jnp.maximum(t, 0.0)                                    # (bb*H, W*P)

    # branch3x3 / conv2: 3x3 conv (pad=1) + bn2 + relu.
    # Column taps + channel mixing live in R_ky, row taps (and the row part of
    # the center crop) live in L_ky — all pure matmuls, no relayouts.
    m0 = jnp.dot(t, r_ref[0], preferred_element_type=f32)
    m1 = jnp.dot(t, r_ref[1], preferred_element_type=f32)
    m2 = jnp.dot(t, r_ref[2], preferred_element_type=f32)
    t2 = (jnp.dot(l_ref[0], m0, preferred_element_type=f32)
          + jnp.dot(l_ref[1], m1, preferred_element_type=f32)
          + jnp.dot(l_ref[2], m2, preferred_element_type=f32)
          + b2_ref[...])
    t2 = jnp.maximum(t2, 0.0)                                  # (bb*Hc, W*P)

    # branch1x1 input rows, center-cropped via a selection matmul.
    xc = jnp.dot(sel_ref[...], x, preferred_element_type=f32)  # (bb*Hc, W*Cin)

    # conv3 (1x1 -> 4P) + bn3 and conv1x1 + bn1x1, with the channel concat
    # ([branch3x3, branch1x1] per pixel) and the column crop folded into the
    # block weights -> one lane-dense (bb*Hc, Wc*5P) result.
    out = (jnp.dot(t2, w3_ref[...], preferred_element_type=f32)
           + jnp.dot(xc, w4_ref[...], preferred_element_type=f32)
           + bc_ref[...])
    if last_relu:
        out = jnp.maximum(out, 0.0)
    out_ref[0] = out.astype(out_ref.dtype)


# ----------------------------------------------------------------------------
# Glue: BN folding, matmul-form weight construction, pallas_call.
# ----------------------------------------------------------------------------
def _fold_bn(bn_params, eps):
    gamma, beta, mean, var = bn_params
    scale = gamma / jnp.sqrt(var + eps)
    bias = beta - mean * scale
    return scale.astype(jnp.float32), bias.astype(jnp.float32)


def _default_batch_block(n):
    """How many batch elements to fold into one grid step.

    Single-TensorCore chips (v5e/v6e): fold the whole batch (grid of 1) to
    remove per-step pipeline overhead.  Multi-core chips (v4/v5p/v7x): one
    element per step so the "parallel" grid axis shards across cores.
    """
    try:
        kind = jax.devices()[0].device_kind.lower()
    except Exception:
        return 1
    if any(tag in kind for tag in ("v5 lite", "v5e", "v6 lite", "v6e", "v6")):
        return n
    return 1


def inception_m_pallas(x_nchw, params, last_relu=True, batch_block=None):
    N, Cin, H, W = x_nchw.shape
    P = params['conv1_w'].shape[0]
    Hc, Wc = H - 2, W - 2
    C3, CC = 4 * P, 5 * P
    f32 = jnp.float32

    bb = _default_batch_block(N) if batch_block is None else batch_block
    if N % bb:
        bb = 1
    G = N // bb

    # ---- fold BN (inference) into per-channel scale / bias ----
    s1, b1 = _fold_bn(params['bn1'], 1e-5)
    s2, b2 = _fold_bn(params['bn2'], 1e-5)
    s3, b3 = _fold_bn(params['bn3'], 1e-5)
    s4, b4 = _fold_bn(params['bn1x1'], 1e-3)   # 1x1 branch uses eps=1e-3

    # conv weights -> (Cin, Cout) / (3, 3, Cin, Cout), BN scale folded in.
    w1 = params['conv1_w'][:, :, 0, 0].T * s1[None, :]                              # (Cin, P)
    w2 = jnp.transpose(params['conv2_w'], (2, 3, 1, 0)) * s2[None, None, None, :]   # (3,3,P,P)
    w3 = params['conv3_w'][:, :, 0, 0].T * s3[None, :]                              # (P, 4P)
    w4 = params['conv1x1_w'][:, :, 0, 0].T * s4[None, :]                            # (Cin, P)

    # ---- matmul-form weights for the channels-interleaved (rows, W*C) layout ----
    eye_w = jnp.eye(W, dtype=f32)
    A1 = jnp.kron(eye_w, w1)                        # (W*Cin, W*P)  block-diagonal 1x1
    b1r = jnp.tile(b1, W)[None, :]                  # (1, W*P)

    r_list = []
    for ky in range(3):
        r = jnp.zeros((W * P, W * P), f32)
        for kx in range(3):
            shift = jnp.eye(W, W, k=1 - kx, dtype=f32)   # column tap kx; zero-pad at edges
            r = r + jnp.kron(shift, w2[ky, kx])
        r_list.append(r)
    R = jnp.stack(r_list)                           # (3, W*P, W*P)
    b2r = jnp.tile(b2, W)[None, :]                  # (1, W*P)

    eye_b = jnp.eye(bb, dtype=f32)
    L = jnp.stack([jnp.kron(eye_b, jnp.eye(Hc, H, k=ky, dtype=f32))
                   for ky in range(3)])             # (3, bb*Hc, bb*H)  row taps + row crop
    Sel = jnp.kron(eye_b, jnp.eye(Hc, H, k=1, dtype=f32))   # (bb*Hc, bb*H)  row crop only

    # Final stage: conv3+bn3 (channels 0..4P-1) | conv1x1+bn1x1 (channels 4P..5P-1)
    # with the column crop (keep cols 1..W-2) folded into the block structure.
    crop = jnp.eye(W, Wc, k=-1, dtype=f32)                          # (W, Wc)
    M3 = jnp.concatenate([w3, jnp.zeros((P, P), f32)], axis=1)      # (P, 5P)
    M4 = jnp.concatenate([jnp.zeros((Cin, C3), f32), w4], axis=1)   # (Cin, 5P)
    W3big = jnp.kron(crop, M3)                      # (W*P,   Wc*5P)
    W4big = jnp.kron(crop, M4)                      # (W*Cin, Wc*5P)
    bcat = jnp.tile(jnp.concatenate([b3, b4]), Wc)[None, :]         # (1, Wc*5P)

    # ---- input layout: NCHW -> (G, bb*H, W*Cin); lane-dense, no in-kernel reshape
    x = jnp.transpose(x_nchw, (0, 2, 3, 1)).astype(f32)             # NHWC
    x = x.reshape(N, H, W * Cin).reshape(G, bb * H, W * Cin)

    def _const_spec(arr):
        nd = arr.ndim
        return pl.BlockSpec(arr.shape, lambda g, _nd=nd: (0,) * _nd)

    kernel = functools.partial(_inception_kernel, last_relu=last_relu)

    out = pl.pallas_call(
        kernel,
        grid=(G,),
        in_specs=[
            pl.BlockSpec((1, bb * H, W * Cin), lambda g: (g, 0, 0)),
            _const_spec(A1), _const_spec(b1r),
            _const_spec(R), _const_spec(b2r),
            _const_spec(L), _const_spec(Sel),
            _const_spec(W3big), _const_spec(W4big), _const_spec(bcat),
        ],
        out_specs=pl.BlockSpec((1, bb * Hc, Wc * CC), lambda g: (g, 0, 0)),
        out_shape=jax.ShapeDtypeStruct((G, bb * Hc, Wc * CC), f32),
        compiler_params=pltpu.CompilerParams(
            dimension_semantics=("parallel",)),
    )(x, A1, b1r, R, b2r, L, Sel, W3big, W4big, bcat)

    # (G, bb*Hc, Wc*5P) -> (N, Hc, Wc, 5P) is a pure metadata reshape; then one
    # small transpose back to the module's NCHW output layout.
    out = out.reshape(N, Hc, Wc, CC)
    return jnp.transpose(out, (0, 3, 1, 2))


# ----------------------------------------------------------------------------
# Deterministic parameter init (shapes per the PyTorch module __init__).
# ----------------------------------------------------------------------------
def init_params(key, in_channels, planes):
    ks = jax.random.split(key, 8)

    def bn(k, c):
        k1, k2, k3, k4 = jax.random.split(k, 4)
        gamma = jax.random.uniform(k1, (c,), minval=0.5, maxval=1.5)
        beta = jax.random.normal(k2, (c,)) * 0.1
        mean = jax.random.normal(k3, (c,)) * 0.1
        var = jax.random.uniform(k4, (c,), minval=0.5, maxval=1.5)
        return (gamma, beta, mean, var)

    params = {
        'conv1_w': jax.random.normal(ks[0], (planes, in_channels, 1, 1)) * 0.2,
        'bn1': bn(ks[1], planes),
        'conv2_w': jax.random.normal(ks[2], (planes, planes, 3, 3)) * 0.2,
        'bn2': bn(ks[3], planes),
        'conv3_w': jax.random.normal(ks[4], (planes * 4, planes, 1, 1)) * 0.2,
        'bn3': bn(ks[5], planes * 4),
        'conv1x1_w': jax.random.normal(ks[6], (planes, in_channels, 1, 1)) * 0.2,
        'bn1x1': bn(ks[7], planes),
    }
    return jax.tree.map(lambda a: a.astype(jnp.float32), params)


# ----------------------------------------------------------------------------
# Pure-JAX reference (NCHW, BN in eval mode) — identical to the previous,
# already-validated version.
# ----------------------------------------------------------------------------
def inception_m_ref(x, params, last_relu=True):
    def conv(t, w, pad):
        return jax.lax.conv_general_dilated(
            t, w, (1, 1), [(pad, pad), (pad, pad)],
            dimension_numbers=('NCHW', 'OIHW', 'NCHW'))

    def bn(t, p, eps):
        g, b, m, v = (a[None, :, None, None] for a in p)
        return (t - m) / jnp.sqrt(v + eps) * g + b

    relu = lambda t: jnp.maximum(t, 0.0)

    t = relu(bn(conv(x, params['conv1_w'], 0), params['bn1'], 1e-5))
    t = relu(bn(conv(t, params['conv2_w'], 1), params['bn2'], 1e-5))
    t = bn(conv(t, params['conv3_w'], 0), params['bn3'], 1e-5)
    if last_relu:
        t = relu(t)

    u = bn(conv(x, params['conv1x1_w'], 0), params['bn1x1'], 1e-3)
    if last_relu:
        u = relu(u)

    out = jnp.concatenate([t, u], axis=1)
    return out[:, :, 1:-1, 1:-1]


if __name__ == "__main__":
    key = jax.random.PRNGKey(0)
    kx, kp = jax.random.split(key)

    N, Cin, H, W, planes = 2, 4, 16, 16, 4
    x = jax.random.normal(kx, (N, Cin, H, W), dtype=jnp.float32)
    params = init_params(kp, Cin, planes)

    fwd = jax.jit(functools.partial(inception_m_pallas, last_relu=True))
    out = jax.block_until_ready(fwd(x, params))

    assert out.shape == (N, planes * 5, H - 2, W - 2), out.shape

    ref = inception_m_ref(x, params, last_relu=True)
    np.testing.assert_allclose(np.asarray(out), np.asarray(ref),
                               rtol=1e-4, atol=1e-4)
    print("KERNEL_OK")
</pallas_src>

<mosaic_0001>
module attributes {stable_mosaic.version = 11 : i64} {
  func.func @_inception_kernel(%arg0: i32, %arg1: memref<1x16x64xf32, #tpu.memory_space<vmem>>, %arg2: memref<64x64xf32, #tpu.memory_space<vmem>>, %arg3: memref<1x64xf32, #tpu.memory_space<vmem>>, %arg4: memref<3x64x64xf32, #tpu.memory_space<vmem>>, %arg5: memref<1x64xf32, #tpu.memory_space<vmem>>, %arg6: memref<3x14x16xf32, #tpu.memory_space<vmem>>, %arg7: memref<14x16xf32, #tpu.memory_space<vmem>>, %arg8: memref<64x280xf32, #tpu.memory_space<vmem>>, %arg9: memref<64x280xf32, #tpu.memory_space<vmem>>, %arg10: memref<1x280xf32, #tpu.memory_space<vmem>>, %arg11: memref<1x14x280xf32, #tpu.memory_space<vmem>>) attributes {dimension_semantics = [#tpu.dimension_semantics<parallel>], iteration_bounds = array<i64: 2>, scalar_prefetch = 0 : i64, scratch_operands = 0 : i64, tpu.core_type = #tpu.core_type<tc>, window_params = [{transform_indices = @transform_0, window_bounds = array<i64: 1, 16, 64>}, {pipeline_mode = #tpu.pipeline_mode<synchronous>, transform_indices = @transform_1, window_bounds = array<i64: 64, 64>}, {pipeline_mode = #tpu.pipeline_mode<synchronous>, transform_indices = @transform_2, window_bounds = array<i64: 1, 64>}, {pipeline_mode = #tpu.pipeline_mode<synchronous>, transform_indices = @transform_3, window_bounds = array<i64: 3, 64, 64>}, {pipeline_mode = #tpu.pipeline_mode<synchronous>, transform_indices = @transform_4, window_bounds = array<i64: 1, 64>}, {pipeline_mode = #tpu.pipeline_mode<synchronous>, transform_indices = @transform_5, window_bounds = array<i64: 3, 14, 16>}, {pipeline_mode = #tpu.pipeline_mode<synchronous>, transform_indices = @transform_6, window_bounds = array<i64: 14, 16>}, {pipeline_mode = #tpu.pipeline_mode<synchronous>, transform_indices = @transform_7, window_bounds = array<i64: 64, 280>}, {pipeline_mode = #tpu.pipeline_mode<synchronous>, transform_indices = @transform_8, window_bounds = array<i64: 64, 280>}, {pipeline_mode = #tpu.pipeline_mode<synchronous>, transform_indices = @transform_9, window_bounds = array<i64: 1, 280>}, {transform_indices = @transform_10, window_bounds = array<i64: 1, 14, 280>}]} {
    %c0 = arith.constant 0 : index
    %c0_0 = arith.constant 0 : index
    %c0_1 = arith.constant 0 : index
    %0 = vector.load %arg1[%c0, %c0_0, %c0_1] : memref<1x16x64xf32, #tpu.memory_space<vmem>>, vector<1x16x64xf32>
    %1 = vector.shape_cast %0 : vector<1x16x64xf32> to vector<16x64xf32>
    %c0_2 = arith.constant 0 : index
    %c0_3 = arith.constant 0 : index
    %2 = vector.load %arg2[%c0_2, %c0_3] : memref<64x64xf32, #tpu.memory_space<vmem>>, vector<64x64xf32>
    %cst = arith.constant dense<0.000000e+00> : vector<16x64xf32>
    %3 = tpu.matmul %1, %2, %cst {dimension_numbers = #tpu.dot_dimension_numbers<[1], [0], [0], [1], [0, 0, 1, 1], [], []>} : vector<16x64xf32>, vector<64x64xf32>, vector<16x64xf32> -> vector<16x64xf32>
    %c0_4 = arith.constant 0 : index
    %c0_5 = arith.constant 0 : index
    %4 = vector.load %arg3[%c0_4, %c0_5] : memref<1x64xf32, #tpu.memory_space<vmem>>, vector<1x64xf32>
    %5 = vector.broadcast %4 : vector<1x64xf32> to vector<16x64xf32>
    %6 = arith.addf %3, %5 : vector<16x64xf32>
    %cst_6 = arith.constant 0.000000e+00 : f32
    %7 = vector.broadcast %cst_6 : f32 to vector<16x64xf32>
    %8 = arith.maximumf %6, %7 : vector<16x64xf32>
    %c0_7 = arith.constant 0 : index
    %c0_8 = arith.constant 0 : index
    %c0_9 = arith.constant 0 : index
    %9 = vector.load %arg4[%c0_7, %c0_8, %c0_9] : memref<3x64x64xf32, #tpu.memory_space<vmem>>, vector<1x64x64xf32>
    %10 = vector.shape_cast %9 : vector<1x64x64xf32> to vector<64x64xf32>
    %cst_10 = arith.constant dense<0.000000e+00> : vector<16x64xf32>
    %11 = tpu.matmul %8, %10, %cst_10 {dimension_numbers = #tpu.dot_dimension_numbers<[1], [0], [0], [1], [0, 0, 1, 1], [], []>} : vector<16x64xf32>, vector<64x64xf32>, vector<16x64xf32> -> vector<16x64xf32>
    %c1 = arith.constant 1 : index
    %c0_11 = arith.constant 0 : index
    %c0_12 = arith.constant 0 : index
    %12 = vector.load %arg4[%c1, %c0_11, %c0_12] : memref<3x64x64xf32, #tpu.memory_space<vmem>>, vector<1x64x64xf32>
    %13 = vector.shape_cast %12 : vector<1x64x64xf32> to vector<64x64xf32>
    %cst_13 = arith.constant dense<0.000000e+00> : vector<16x64xf32>
    %14 = tpu.matmul %8, %13, %cst_13 {dimension_numbers = #tpu.dot_dimension_numbers<[1], [0], [0], [1], [0, 0, 1, 1], [], []>} : vector<16x64xf32>, vector<64x64xf32>, vector<16x64xf32> -> vector<16x64xf32>
    %c2 = arith.constant 2 : index
    %c0_14 = arith.constant 0 : index
    %c0_15 = arith.constant 0 : index
    %15 = vector.load %arg4[%c2, %c0_14, %c0_15] : memref<3x64x64xf32, #tpu.memory_space<vmem>>, vector<1x64x64xf32>
    %16 = vector.shape_cast %15 : vector<1x64x64xf32> to vector<64x64xf32>
    %cst_16 = arith.constant dense<0.000000e+00> : vector<16x64xf32>
    %17 = tpu.matmul %8, %16, %cst_16 {dimension_numbers = #tpu.dot_dimension_numbers<[1], [0], [0], [1], [0, 0, 1, 1], [], []>} : vector<16x64xf32>, vector<64x64xf32>, vector<16x64xf32> -> vector<16x64xf32>
    %c0_17 = arith.constant 0 : index
    %c0_18 = arith.constant 0 : index
    %c0_19 = arith.constant 0 : index
    %18 = vector.load %arg6[%c0_17, %c0_18, %c0_19] : memref<3x14x16xf32, #tpu.memory_space<vmem>>, vector<1x14x16xf32>
    %19 = vector.shape_cast %18 : vector<1x14x16xf32> to vector<14x16xf32>
    %cst_20 = arith.constant dense<0.000000e+00> : vector<14x64xf32>
    %20 = tpu.matmul %19, %11, %cst_20 {dimension_numbers = #tpu.dot_dimension_numbers<[1], [0], [0], [1], [0, 0, 1, 1], [], []>} : vector<14x16xf32>, vector<16x64xf32>, vector<14x64xf32> -> vector<14x64xf32>
    %c1_21 = arith.constant 1 : index
    %c0_22 = arith.constant 0 : index
    %c0_23 = arith.constant 0 : index
    %21 = vector.load %arg6[%c1_21, %c0_22, %c0_23] : memref<3x14x16xf32, #tpu.memory_space<vmem>>, vector<1x14x16xf32>
    %22 = vector.shape_cast %21 : vector<1x14x16xf32> to vector<14x16xf32>
    %cst_24 = arith.constant dense<0.000000e+00> : vector<14x64xf32>
    %23 = tpu.matmul %22, %14, %cst_24 {dimension_numbers = #tpu.dot_dimension_numbers<[1], [0], [0], [1], [0, 0, 1, 1], [], []>} : vector<14x16xf32>, vector<16x64xf32>, vector<14x64xf32> -> vector<14x64xf32>
    %24 = arith.addf %20, %23 : vector<14x64xf32>
    %c2_25 = arith.constant 2 : index
    %c0_26 = arith.constant 0 : index
    %c0_27 = arith.constant 0 : index
    %25 = vector.load %arg6[%c2_25, %c0_26, %c0_27] : memref<3x14x16xf32, #tpu.memory_space<vmem>>, vector<1x14x16xf32>
    %26 = vector.shape_cast %25 : vector<1x14x16xf32> to vector<14x16xf32>
    %cst_28 = arith.constant dense<0.000000e+00> : vector<14x64xf32>
    %27 = tpu.matmul %26, %17, %cst_28 {dimension_numbers = #tpu.dot_dimension_numbers<[1], [0], [0], [1], [0, 0, 1, 1], [], []>} : vector<14x16xf32>, vector<16x64xf32>, vector<14x64xf32> -> vector<14x64xf32>
    %28 = arith.addf %24, %27 : vector<14x64xf32>
    %c0_29 = arith.constant 0 : index
    %c0_30 = arith.constant 0 : index
    %29 = vector.load %arg5[%c0_29, %c0_30] : memref<1x64xf32, #tpu.memory_space<vmem>>, vector<1x64xf32>
    %30 = vector.broadcast %29 : vector<1x64xf32> to vector<14x64xf32>
    %31 = arith.addf %28, %30 : vector<14x64xf32>
    %cst_31 = arith.constant 0.000000e+00 : f32
    %32 = vector.broadcast %cst_31 : f32 to vector<14x64xf32>
    %33 = arith.maximumf %31, %32 : vector<14x64xf32>
    %c0_32 = arith.constant 0 : index
    %c0_33 = arith.constant 0 : index
    %34 = vector.load %arg7[%c0_32, %c0_33] : memref<14x16xf32, #tpu.memory_space<vmem>>, vector<14x16xf32>
    %cst_34 = arith.constant dense<0.000000e+00> : vector<14x64xf32>
    %35 = tpu.matmul %34, %1, %cst_34 {dimension_numbers = #tpu.dot_dimension_numbers<[1], [0], [0], [1], [0, 0, 1, 1], [], []>} : vector<14x16xf32>, vector<16x64xf32>, vector<14x64xf32> -> vector<14x64xf32>
    %c0_35 = arith.constant 0 : index
    %c0_36 = arith.constant 0 : index
    %36 = vector.load %arg8[%c0_35, %c0_36] : memref<64x280xf32, #tpu.memory_space<vmem>>, vector<64x280xf32>
    %cst_37 = arith.constant dense<0.000000e+00> : vector<14x280xf32>
    %37 = tpu.matmul %33, %36, %cst_37 {dimension_numbers = #tpu.dot_dimension_numbers<[1], [0], [0], [1], [0, 0, 1, 1], [], []>} : vector<14x64xf32>, vector<64x280xf32>, vector<14x280xf32> -> vector<14x280xf32>
    %c0_38 = arith.constant 0 : index
    %c0_39 = arith.constant 0 : index
    %38 = vector.load %arg9[%c0_38, %c0_39] : memref<64x280xf32, #tpu.memory_space<vmem>>, vector<64x280xf32>
    %cst_40 = arith.constant dense<0.000000e+00> : vector<14x280xf32>
    %39 = tpu.matmul %35, %38, %cst_40 {dimension_numbers = #tpu.dot_dimension_numbers<[1], [0], [0], [1], [0, 0, 1, 1], [], []>} : vector<14x64xf32>, vector<64x280xf32>, vector<14x280xf32> -> vector<14x280xf32>
    %40 = arith.addf %37, %39 : vector<14x280xf32>
    %c0_41 = arith.constant 0 : index
    %c0_42 = arith.constant 0 : index
    %41 = vector.load %arg10[%c0_41, %c0_42] : memref<1x280xf32, #tpu.memory_space<vmem>>, vector<1x280xf32>
    %42 = vector.broadcast %41 : vector<1x280xf32> to vector<14x280xf32>
    %43 = arith.addf %40, %42 : vector<14x280xf32>
    %cst_43 = arith.constant 0.000000e+00 : f32
    %44 = vector.broadcast %cst_43 : f32 to vector<14x280xf32>
    %45 = arith.maximumf %43, %44 : vector<14x280xf32>
    %c0_44 = arith.constant 0 : index
    %c0_45 = arith.constant 0 : index
    %c0_46 = arith.constant 0 : index
    %46 = vector.load %arg11[%c0_44, %c0_45, %c0_46] : memref<1x14x280xf32, #tpu.memory_space<vmem>>, vector<1x14x280xf32>
    %47 = vector.shape_cast %46 : vector<1x14x280xf32> to vector<14x280xf32>
    %48 = vector.shape_cast %45 : vector<14x280xf32> to vector<1x14x280xf32>
    tpu.vector_store %arg11[%c0_44, %c0_45, %c0_46], %48 {strides = array<i32>} : memref<1x14x280xf32, #tpu.memory_space<vmem>>, vector<1x14x280xf32>,
    return
  }
  func.func @transform_0(%arg0: i32) -> (i32, i32, i32) {
    %c0_i32 = arith.constant 0 : i32
    %c0_i32_0 = arith.constant 0 : i32
    %c0_i32_1 = arith.constant 0 : i32
    return %arg0, %c0_i32, %c0_i32_0 : i32, i32, i32
  }
  func.func @transform_1(%arg0: i32) -> (i32, i32) {
    %c0_i32 = arith.constant 0 : i32
    %c0_i32_0 = arith.constant 0 : i32
    %c0_i32_1 = arith.constant 0 : i32
    return %c0_i32, %c0_i32_0 : i32, i32
  }
  func.func @transform_2(%arg0: i32) -> (i32, i32) {
    %c0_i32 = arith.constant 0 : i32
    %c0_i32_0 = arith.constant 0 : i32
    %c0_i32_1 = arith.constant 0 : i32
    return %c0_i32, %c0_i32_0 : i32, i32
  }
  func.func @transform_3(%arg0: i32) -> (i32, i32, i32) {
    %c0_i32 = arith.constant 0 : i32
    %c0_i32_0 = arith.constant 0 : i32
    %c0_i32_1 = arith.constant 0 : i32
    %c0_i32_2 = arith.constant 0 : i32
    return %c0_i32, %c0_i32_0, %c0_i32_1 : i32, i32, i32
  }
  func.func @transform_4(%arg0: i32) -> (i32, i32) {
    %c0_i32 = arith.constant 0 : i32
    %c0_i32_0 = arith.constant 0 : i32
    %c0_i32_1 = arith.constant 0 : i32
    return %c0_i32, %c0_i32_0 : i32, i32
  }
  func.func @transform_5(%arg0: i32) -> (i32, i32, i32) {
    %c0_i32 = arith.constant 0 : i32
    %c0_i32_0 = arith.constant 0 : i32
    %c0_i32_1 = arith.constant 0 : i32
    %c0_i32_2 = arith.constant 0 : i32
    return %c0_i32, %c0_i32_0, %c0_i32_1 : i32, i32, i32
  }
  func.func @transform_6(%arg0: i32) -> (i32, i32) {
    %c0_i32 = arith.constant 0 : i32
    %c0_i32_0 = arith.constant 0 : i32
    %c0_i32_1 = arith.constant 0 : i32
    return %c0_i32, %c0_i32_0 : i32, i32
  }
  func.func @transform_7(%arg0: i32) -> (i32, i32) {
    %c0_i32 = arith.constant 0 : i32
    %c0_i32_0 = arith.constant 0 : i32
    %c0_i32_1 = arith.constant 0 : i32
    return %c0_i32, %c0_i32_0 : i32, i32
  }
  func.func @transform_8(%arg0: i32) -> (i32, i32) {
    %c0_i32 = arith.constant 0 : i32
    %c0_i32_0 = arith.constant 0 : i32
    %c0_i32_1 = arith.constant 0 : i32
    return %c0_i32, %c0_i32_0 : i32, i32
  }
  func.func @transform_9(%arg0: i32) -> (i32, i32) {
    %c0_i32 = arith.constant 0 : i32
    %c0_i32_0 = arith.constant 0 : i32
    %c0_i32_1 = arith.constant 0 : i32
    return %c0_i32, %c0_i32_0 : i32, i32
  }
  func.func @transform_10(%arg0: i32) -> (i32, i32, i32) {
    %c0_i32 = arith.constant 0 : i32
    %c0_i32_0 = arith.constant 0 : i32
    %c0_i32_1 = arith.constant 0 : i32
    return %arg0, %c0_i32, %c0_i32_0 : i32, i32, i32
  }
}

</mosaic_0001>

<llo_original>
// kernel: tile.28
$region0: #{tile.28}
  #allocation0 [shape = 's32[1]{0}', space=sflag, size = 0x4, scoped, tag = 'scoped memory for tile.28']
  %s0 = inlined_call_operand.vmem [shape: f32[20], index: 0, kind: input, shape index: {}]
  %s1 = inlined_call_operand.vmem [shape: f32[14,20], index: 1, kind: output, shape index: {}]
  // Predicated region
  $region2: #{tile.28} parent=0 // pred_check
    _
  $region3: #{tile.28} parent=0 // pred_check_branch
    %3 = sbr.rel (0) target = $region5
  $region4: #{tile.28} parent=0 // pred_region
    _
  $region5: #{tile.28} parent=0 // pred_fallthru
    _
  %v4 = vld [vmem:[%s0] ss:$0 sm:$0xff]
  %5 = vst [vmem:[%s1] sm:$0xff] %v4
  %s6 = scalar_lea.vmem %s1, 8
  %7 = vst [vmem:[%s6] sm:$0xff] %v4

// kernel: tile.29
$region0: #{tile.29}
  %s0 = inlined_call_operand.vmem [shape: f32[14,20], index: 0, kind: input, shape index: {}]
  %s1 = inlined_call_operand.vmem [shape: f32[1,280], index: 1, kind: output, shape index: {}]
  $region1: #{tile.29} parent=0
    #allocation0 [shape = 'u8[12288]{0}', space=vmem, size = 0x3000, scoped, tag = 'scoped mem for output reshape']
    %v2 = vld [vmem:[%s0] sm:$0x1]
    %vm3 = vcmask 162816
    %4 = vst.msk [vmem:[#allocation0] sm:$0x1] %vm3, %v2
    %s5 = scalar_lea.vmem %s0, 6
    %v6 = vld [vmem:[%s5] sm:$0x1]
    %s7 = scalar_lea.vmem %s0, 6
    %v8 = vld [vmem:[%s7] sm:$0x1]
    %vm9 = vcmask 64512
    %v10 = vsel %vm9, %v8, %v6
    %11 = vrot.lane.b32.xlu0 %v10, 120
    %v12 = vpop.permute.xlu0 %11
    %vm13 = vcmask 97280
    %s14 = scalar_lea.vmem [#allocation0], 8
    %15 = vst.msk [vmem:[%s14] sm:$0x1] %vm13, %v12
    %vm16 = vcmask 1048512
    %17 = vst.msk [vmem:[#allocation0] sm:$0x1] %vm16, %v12
    %s18 = scalar_lea.vmem %s0, 12
    %v19 = vld [vmem:[%s18] sm:$0x1]
    %s20 = scalar_lea.vmem %s0, 12
    %v21 = vld [vmem:[%s20] sm:$0x1]
    %vm22 = vcmask 130048
    %v23 = vsel %vm22, %v21, %v19
    %24 = vrot.lane.b32.xlu0 %v23, 112
    %v25 = vpop.permute.xlu0 %24
    %vm26 = vcmask 31744
    %s27 = scalar_lea.vmem [#allocation0], 16
    %28 = vst.msk [vmem:[%s27] sm:$0x1] %vm26, %v25
    %vm29 = vcmask 1048448
    %s30 = scalar_lea.vmem [#allocation0], 8
    %31 = vst.msk [vmem:[%s30] sm:$0x1] %vm29, %v25
    %s32 = scalar_lea.vmem %s0, 5
    %v33 = vld [vmem:[%s32] sm:$0x1]
    %34 = vrot.lane.b32.xlu0 %v33, 100
    %v35 = vpop.permute.xlu0 %34
    %vm36 = vcmask 982816
    %37 = vst.msk [vmem:[#allocation0] sm:$0x1] %vm36, %v35
    %s38 = scalar_lea.vmem %s0, 11
    %v39 = vld [vmem:[%s38] sm:$0x1]
    %40 = vrot.lane.b32.xlu0 %v39, 92
    %v41 = vpop.permute.xlu0 %40
    %vm42 = vcmask 917216
    %s43 = scalar_lea.vmem [#allocation0], 8
    %44 = vst.msk [vmem:[%s43] sm:$0x1] %vm42, %v41
    %s45 = scalar_lea.vmem %s0, 4
    %v46 = vld [vmem:[%s45] sm:$0x1]
    %47 = vrot.lane.b32.xlu0 %v46, 80
    %v48 = vpop.permute.xlu0 %47
    %vm49 = vcmask 818816
    %50 = vst.msk [vmem:[#allocation0] sm:$0x1] %vm49, %v48
    %s51 = scalar_lea.vmem %s0, 10
    %v52 = vld [vmem:[%s51] sm:$0x1]
    %53 = vrot.lane.b32.xlu0 %v52, 72
    %v54 = vpop.permute.xlu0 %53
    %vm55 = vcmask 753216
    %s56 = scalar_lea.vmem [#allocation0], 8
    %57 = vst.msk [vmem:[%s56] sm:$0x1] %vm55, %v54
    %s58 = scalar_lea.vmem %s0, 3
    %v59 = vld [vmem:[%s58] sm:$0x1]
    %60 = vrot.lane.b32.xlu0 %v59, 60
    %v61 = vpop.permute.xlu0 %60
    %vm62 = vcmask 654816
    %63 = vst.msk [vmem:[#allocation0] sm:$0x1] %vm62, %v61
    %s64 = scalar_lea.vmem %s0, 9
    %v65 = vld [vmem:[%s64] sm:$0x1]
    %66 = vrot.lane.b32.xlu0 %v65, 52
    %v67 = vpop.permute.xlu0 %66
    %vm68 = vcmask 589216
    %s69 = scalar_lea.vmem [#allocation0], 8
    %70 = vst.msk [vmem:[%s69] sm:$0x1] %vm68, %v67
    %s71 = scalar_lea.vmem %s0, 2
    %v72 = vld [vmem:[%s71] sm:$0x1]
    %73 = vrot.lane.b32.xlu0 %v72, 40
    %v74 = vpop.permute.xlu0 %73
    %vm75 = vcmask 490816
    %76 = vst.msk [vmem:[#allocation0] sm:$0x1] %vm75, %v74
    %s77 = scalar_lea.vmem %s0, 8
    %v78 = vld [vmem:[%s77] sm:$0x1]
    %79 = vrot.lane.b32.xlu0 %v78, 32
    %v80 = vpop.permute.xlu0 %79
    %vm81 = vcmask 425216
    %s82 = scalar_lea.vmem [#allocation0], 8
    %83 = vst.msk [vmem:[%s82] sm:$0x1] %vm81, %v80
    %s84 = scalar_lea.vmem %s0, 1
    %v85 = vld [vmem:[%s84] sm:$0x1]
    %86 = vrot.lane.b32.xlu0 %v85, 20
    %v87 = vpop.permute.xlu0 %86
    %vm88 = vcmask 326816
    %89 = vst.msk [vmem:[#allocation0] sm:$0x1] %vm88, %v87
    %s90 = scalar_lea.vmem %s0, 7
    %v91 = vld [vmem:[%s90] sm:$0x1]
    %92 = vrot.lane.b32.xlu0 %v91, 12
    %v93 = vpop.permute.xlu0 %92
    %vm94 = vcmask 261216
    %s95 = scalar_lea.vmem [#allocation0], 8
    %96 = vst.msk [vmem:[%s95] sm:$0x1] %vm94, %v93
    %s97 = scalar_lea.vmem %s0, 13
    %v98 = vld [vmem:[%s97] sm:$0x1]
    %99 = vrot.lane.b32.xlu0 %v98, 4
    %v100 = vpop.permute.xlu0 %99
    %vm101 = vcmask 195616
    %s102 = scalar_lea.vmem [#allocation0], 16
    %103 = vst.msk [vmem:[%s102] sm:$0x1] %vm101, %v100
    %s105 = sshllo.u32 0, 1
    %v107 = vld [vmem:[#allocation0] sm:%s105]
    %s108 = sshllo.u32 0, 1
    %109 = vst [vmem:[%s1] sm:%s108] %v107
    %s110 = scalar_lea.vmem [#allocation0], 8
    %v111 = vld [vmem:[%s110] sm:%s105]
    %s112 = sshllo.u32 0, 1
    %s113 = scalar_lea.vmem %s1, 1
    %114 = vst [vmem:[%s113] sm:%s112] %v111
    %s115 = scalar_lea.vmem [#allocation0], 16
    %v116 = vld [vmem:[%s115] sm:%s105]
    %s117 = sshllo.u32 0, 1
    %s118 = smul.addr 1, 2
    %s119 = scalar_lea.vmem %s1, %s118
    %120 = vst [vmem:[%s119] sm:%s117] %v116

// kernel: tile.18
$region0: #{tile.18}
  #allocation0 [shape = 's32[1]{0}', space=sflag, size = 0x4, scoped, tag = 'scoped memory for tile.18']
  %s0 = inlined_call_operand.vmem [shape: f32[4], index: 0, kind: input, shape index: {}]
  %s1 = inlined_call_operand.vmem [shape: f32[16,4], index: 1, kind: output, shape index: {}]
  // Predicated region
  $region2: #{tile.18} parent=0 // pred_check
    _
  $region3: #{tile.18} parent=0 // pred_check_branch
    %3 = sbr.rel (0) target = $region5
  $region4: #{tile.18} parent=0 // pred_region
    _
  $region5: #{tile.18} parent=0 // pred_fallthru
    _
  %v4 = vld [vmem:[%s0] ss:$0 sm:$0xff]
  %5 = vst [vmem:[%s1] sm:$0xff] %v4
  %s6 = scalar_lea.vmem %s1, 8
  %7 = vst [vmem:[%s6] sm:$0xff] %v4

// kernel: tile.19
$region0: #{tile.19}
  %s0 = inlined_call_operand.vmem [shape: f32[16,4], index: 0, kind: input, shape index: {}]
  %s1 = inlined_call_operand.vmem [shape: f32[1,64], index: 1, kind: output, shape index: {}]
  $region1: #{tile.19} parent=0
    #allocation0 [shape = 'u8[4096]{0}', space=vmem, size = 0x1000, scoped, tag = 'scoped mem for output reshape']
    %v2 = vld [vmem:[%s0] sm:$0x1]
    %vm3 = vcmask 31744
    %4 = vst.msk [vmem:[#allocation0] sm:$0x1] %vm3, %v2
    %s5 = scalar_lea.vmem %s0, 15
    %v6 = vld [vmem:[%s5] sm:$0x1]
    %7 = vrot.lane.b32.xlu0 %v6, 60
    %v8 = vpop.permute.xlu0 %7
    %vm9 = vcmask 523744
    %10 = vst.msk [vmem:[#allocation0] sm:$0x1] %vm9, %v8
    %s11 = scalar_lea.vmem %s0, 14
    %v12 = vld [vmem:[%s11] sm:$0x1]
    %13 = vrot.lane.b32.xlu0 %v12, 56
    %v14 = vpop.permute.xlu0 %13
    %vm15 = vcmask 490944
    %16 = vst.msk [vmem:[#allocation0] sm:$0x1] %vm15, %v14
    %s17 = scalar_lea.vmem %s0, 13
    %v18 = vld [vmem:[%s17] sm:$0x1]
    %19 = vrot.lane.b32.xlu0 %v18, 52
    %v20 = vpop.permute.xlu0 %19
    %vm21 = vcmask 458144
    %22 = vst.msk [vmem:[#allocation0] sm:$0x1] %vm21, %v20
    %s23 = scalar_lea.vmem %s0, 12
    %v24 = vld [vmem:[%s23] sm:$0x1]
    %25 = vrot.lane.b32.xlu0 %v24, 48
    %v26 = vpop.permute.xlu0 %25
    %vm27 = vcmask 425344
    %28 = vst.msk [vmem:[#allocation0] sm:$0x1] %vm27, %v26
    %s29 = scalar_lea.vmem %s0, 11
    %v30 = vld [vmem:[%s29] sm:$0x1]
    %31 = vrot.lane.b32.xlu0 %v30, 44
    %v32 = vpop.permute.xlu0 %31
    %vm33 = vcmask 392544
    %34 = vst.msk [vmem:[#allocation0] sm:$0x1] %vm33, %v32
    %s35 = scalar_lea.vmem %s0, 10
    %v36 = vld [vmem:[%s35] sm:$0x1]
    %37 = vrot.lane.b32.xlu0 %v36, 40
    %v38 = vpop.permute.xlu0 %37
    %vm39 = vcmask 359744
    %40 = vst.msk [vmem:[#allocation0] sm:$0x1] %vm39, %v38
    %s41 = scalar_lea.vmem %s0, 9
    %v42 = vld [vmem:[%s41] sm:$0x1]
    %43 = vrot.lane.b32.xlu0 %v42, 36
    %v44 = vpop.permute.xlu0 %43
    %vm45 = vcmask 326944
    %46 = vst.msk [vmem:[#allocation0] sm:$0x1] %vm45, %v44
    %s47 = scalar_lea.vmem %s0, 8
    %v48 = vld [vmem:[%s47] sm:$0x1]
    %49 = vrot.lane.b32.xlu0 %v48, 32
    %v50 = vpop.permute.xlu0 %49
    %vm51 = vcmask 294144
    %52 = vst.msk [vmem:[#allocation0] sm:$0x1] %vm51, %v50
    %s53 = scalar_lea.vmem %s0, 7
    %v54 = vld [vmem:[%s53] sm:$0x1]
    %55 = vrot.lane.b32.xlu0 %v54, 28
    %v56 = vpop.permute.xlu0 %55
    %vm57 = vcmask 261344
    %58 = vst.msk [vmem:[#allocation0] sm:$0x1] %vm57, %v56
    %s59 = scalar_lea.vmem %s0, 6
    %v60 = vld [vmem:[%s59] sm:$0x1]
    %61 = vrot.lane.b32.xlu0 %v60, 24
    %v62 = vpop.permute.xlu0 %61
    %vm63 = vcmask 228544
    %64 = vst.msk [vmem:[#allocation0] sm:$0x1] %vm63, %v62
    %s65 = scalar_lea.vmem %s0, 5
    %v66 = vld [vmem:[%s65] sm:$0x1]
    %67 = vrot.lane.b32.xlu0 %v66, 20
    %v68 = vpop.permute.xlu0 %67
    %vm69 = vcmask 195744
    %70 = vst.msk [vmem:[#allocation0] sm:$0x1] %vm69, %v68
    %s71 = scalar_lea.vmem %s0, 4
    %v72 = vld [vmem:[%s71] sm:$0x1]
    %73 = vrot.lane.b32.xlu0 %v72, 16
    %v74 = vpop.permute.xlu0 %73
    %vm75 = vcmask 162944
    %76 = vst.msk [vmem:[#allocation0] sm:$0x1] %vm75, %v74
    %s77 = scalar_lea.vmem %s0, 3
    %v78 = vld [vmem:[%s77] sm:$0x1]
    %79 = vrot.lane.b32.xlu0 %v78, 12
    %v80 = vpop.permute.xlu0 %79
    %vm81 = vcmask 130144
    %82 = vst.msk [vmem:[#allocation0] sm:$0x1] %vm81, %v80
    %s83 = scalar_lea.vmem %s0, 2
    %v84 = vld [vmem:[%s83] sm:$0x1]
    %85 = vrot.lane.b32.xlu0 %v84, 8
    %v86 = vpop.permute.xlu0 %85
    %vm87 = vcmask 97344
    %88 = vst.msk [vmem:[#allocation0] sm:$0x1] %vm87, %v86
    %s89 = scalar_lea.vmem %s0, 1
    %v90 = vld [vmem:[%s89] sm:$0x1]
    %91 = vrot.lane.b32.xlu0 %v90, 4
    %v92 = vpop.permute.xlu0 %91
    %vm93 = vcmask 64544
    %94 = vst.msk [vmem:[#allocation0] sm:$0x1] %vm93, %v92
    %s96 = sshllo.u32 0, 1
    %v98 = vld [vmem:[#allocation0] sm:%s96]
    %s99 = sshllo.u32 0, 1
    %100 = vst [vmem:[%s1] sm:%s99] %v98

// kernel: inception_m_pallas.1
$region0: #{inception_m_pallas.1}
  #allocation0 [shape = 'u32[]', space=smem, size = 0x4, offset = 0x4, fixed_abs, tag = 'smem constant byte address 0x4 - core index']
  #allocation1 [shape = 'u32[144,128]{1,0:T(1,128)}', space=vmem, size = 0x12000, scoped, tag = 'internal scratch']
  %s0 = inlined_call_operand.vmem [shape: f32[2,16,64], index: 0, kind: input, shape index: {}]
  %s1 = inlined_call_operand.vmem [shape: f32[64,64], index: 1, kind: input, shape index: {}]
  %s2 = inlined_call_operand.vmem [shape: f32[1,64], index: 2, kind: input, shape index: {}]
  %s3 = inlined_call_operand.vmem [shape: f32[3,64,64], index: 3, kind: input, shape index: {}]
  %s4 = inlined_call_operand.vmem [shape: f32[1,64], index: 4, kind: input, shape index: {}]
  %s5 = inlined_call_operand.vmem [shape: f32[3,14,16], index: 5, kind: input, shape index: {}]
  %s6 = inlined_call_operand.vmem [shape: f32[14,16], index: 6, kind: input, shape index: {}]
  %s7 = inlined_call_operand.vmem [shape: f32[64,280], index: 7, kind: input, shape index: {}]
  %s8 = inlined_call_operand.vmem [shape: f32[64,280], index: 8, kind: input, shape index: {}]
  %s9 = inlined_call_operand.vmem [shape: f32[1,280], index: 9, kind: input, shape index: {}]
  %s10 = inlined_call_operand.vmem [shape: f32[2,14,280], index: 10, kind: output, shape index: {}]
  %s11 = sld [smem:[#allocation0]]
  $region73: #{inception_m_pallas.1} parent=0
    _
  %s13 = ssub.s32 1, %s11
  %s14 = scalar_select 0, %s13, %s11
  loop: start=0, step=1, limit=4
  $region2: #{inception_m_pallas.1} parent=0 // loop_pre_header
    _
  $region3: #{inception_m_pallas.1} parent=0 // loop_header
    %s16 = sphi 0, %s20
    %p17 = scmp.ge.s32.totalorder %s16, 4
    %s26 = sphi 0, %s28
    %s29 = sphi 0, %s26
    %s30 = sphi 0, %s29
    %s46 = sphi 0, %s30
    %s50 = sphi 0, %s50
    %s52 = sphi 0, %s50
    %s53 = sphi 0, %s52
    %s67 = sphi 0, %s53
    %s71 = sphi 0, %s71
    %s73 = sphi 0, %s71
    %s74 = sphi 0, %s73
    %s88 = sphi 0, %s74
    %s92 = sphi 0, %s92
    %s94 = sphi 0, %s92
    %s95 = sphi 0, %s94
    %s109 = sphi 0, %s95
    %s113 = sphi 0, %s113
    %s115 = sphi 0, %s113
    %s116 = sphi 0, %s115
    %s130 = sphi 0, %s116
    %s134 = sphi 0, %s134
    %s136 = sphi 0, %s134
    %s137 = sphi 0, %s136
    %s151 = sphi 0, %s137
    %s155 = sphi 0, %s155
    %s157 = sphi 0, %s155
    %s158 = sphi 0, %s157
    %s172 = sphi 0, %s158
    %s176 = sphi 0, %s176
    %s178 = sphi 0, %s176
    %s179 = sphi 0, %s178
    %s193 = sphi 0, %s179
    %s197 = sphi 0, %s197
    %s199 = sphi 0, %s197
    %s200 = sphi 0, %s199
    %s214 = sphi 0, %s200
    %s218 = sphi 0, %s218
    %s220 = sphi 0, %s218
    %s221 = sphi 0, %s220
    %s235 = sphi 0, %s221
    %s241 = sphi 0, %s243
    %s244 = sphi 0, %s241
    %s245 = sphi 0, %s244
    %s261 = sphi 0, %s245
  $region4: #{inception_m_pallas.1} parent=0 // loop_header_branch
    %19 = sbr.rel (%p17) target = $region8
  $region5: #{inception_m_pallas.1} parent=0 // loop_body
    %s21 = ssub.s32 %s16, 1
    %s22 = ssub.s32 %s16, 2
    %s23 = sadd.s32 %s16, 1
    %s24 = ssub.s32 %s16, %s23
    %p25 = scmp.eq.s32.totalorder %s24, 0
    %s27 = sadd.s32 %s26, 1
    %s28 = scalar_select %p25, %s26, %s27
    %p31 = pneg %p25
    %p32 = scmp.eq.s32.totalorder %s16, 1
    %p33 = por %p31, %p32
    %p34 = scmp.ne.s32.totalorder %s26, %s29
    %p35 = scmp.eq.s32.totalorder %s16, 0
    %p36 = por %p34, %p35
    %p37 = scmp.ne.s32.totalorder %s26, %s29
    %p38 = scmp.eq.s32.totalorder %s21, 1
    %p39 = por %p37, %p38
    %p40 = scmp.ne.s32.totalorder %s29, %s30
    %p41 = scmp.eq.s32.totalorder %s21, 0
    %p42 = por %p40, %p41
    %p43 = scmp.ne.s32.totalorder %s29, %s30
    %p44 = scmp.eq.s32.totalorder %s22, 1
    %p45 = por %p43, %p44
    %p47 = scmp.ne.s32.totalorder %s30, %s46
    %p48 = scmp.eq.s32.totalorder %s22, 0
    %p49 = por %p47, %p48
    %s51 = sadd.s32 %s50, 1
    %p54 = scmp.eq.s32.totalorder %s16, 1
    %p55 = scmp.ne.s32.totalorder %s50, %s52
    %p56 = scmp.eq.s32.totalorder %s16, 0
    %p57 = por %p55, %p56
    %p58 = scmp.ne.s32.totalorder %s50, %s52
    %p59 = scmp.eq.s32.totalorder %s21, 1
    %p60 = por %p58, %p59
    %p61 = scmp.ne.s32.totalorder %s52, %s53
    %p62 = scmp.eq.s32.totalorder %s21, 0
    %p63 = por %p61, %p62
    %p64 = scmp.ne.s32.totalorder %s52, %s53
    %p65 = scmp.eq.s32.totalorder %s22, 1
    %p66 = por %p64, %p65
    %p68 = scmp.ne.s32.totalorder %s53, %s67
    %p69 = scmp.eq.s32.totalorder %s22, 0
    %p70 = por %p68, %p69
    %s72 = sadd.s32 %s71, 1
    %p75 = scmp.eq.s32.totalorder %s16, 1
    %p76 = scmp.ne.s32.totalorder %s71, %s73
    %p77 = scmp.eq.s32.totalorder %s16, 0
    %p78 = por %p76, %p77
    %p79 = scmp.ne.s32.totalorder %s71, %s73
    %p80 = scmp.eq.s32.totalorder %s21, 1
    %p81 = por %p79, %p80
    %p82 = scmp.ne.s32.totalorder %s73, %s74
    %p83 = scmp.eq.s32.totalorder %s21, 0
    %p84 = por %p82, %p83
    %p85 = scmp.ne.s32.totalorder %s73, %s74
    %p86 = scmp.eq.s32.totalorder %s22, 1
    %p87 = por %p85, %p86
    %p89 = scmp.ne.s32.totalorder %s74, %s88
    %p90 = scmp.eq.s32.totalorder %s22, 0
    %p91 = por %p89, %p90
    %s93 = sadd.s32 %s92, 1
    %p96 = scmp.eq.s32.totalorder %s16, 1
    %p97 = scmp.ne.s32.totalorder %s92, %s94
    %p98 = scmp.eq.s32.totalorder %s16, 0
    %p99 = por %p97, %p98
    %p100 = scmp.ne.s32.totalorder %s92, %s94
    %p101 = scmp.eq.s32.totalorder %s21, 1
    %p102 = por %p100, %p101
    %p103 = scmp.ne.s32.totalorder %s94, %s95
    %p104 = scmp.eq.s32.totalorder %s21, 0
    %p105 = por %p103, %p104
    %p106 = scmp.ne.s32.totalorder %s94, %s95
    %p107 = scmp.eq.s32.totalorder %s22, 1
    %p108 = por %p106, %p107
    %p110 = scmp.ne.s32.totalorder %s95, %s109
    %p111 = scmp.eq.s32.totalorder %s22, 0
    %p112 = por %p110, %p111
    %s114 = sadd.s32 %s113, 1
    %p117 = scmp.eq.s32.totalorder %s16, 1
    %p118 = scmp.ne.s32.totalorder %s113, %s115
    %p119 = scmp.eq.s32.totalorder %s16, 0
    %p120 = por %p118, %p119
    %p121 = scmp.ne.s32.totalorder %s113, %s115
    %p122 = scmp.eq.s32.totalorder %s21, 1
    %p123 = por %p121, %p122
    %p124 = scmp.ne.s32.totalorder %s115, %s116
    %p125 = scmp.eq.s32.totalorder %s21, 0
    %p126 = por %p124, %p125
    %p127 = scmp.ne.s32.totalorder %s115, %s116
    %p128 = scmp.eq.s32.totalorder %s22, 1
    %p129 = por %p127, %p128
    %p131 = scmp.ne.s32.totalorder %s116, %s130
    %p132 = scmp.eq.s32.totalorder %s22, 0
    %p133 = por %p131, %p132
    %s135 = sadd.s32 %s134, 1
    %p138 = scmp.eq.s32.totalorder %s16, 1
    %p139 = scmp.ne.s32.totalorder %s134, %s136
    %p140 = scmp.eq.s32.totalorder %s16, 0
    %p141 = por %p139, %p140
    %p142 = scmp.ne.s32.totalorder %s134, %s136
    %p143 = scmp.eq.s32.totalorder %s21, 1
    %p144 = por %p142, %p143
    %p145 = scmp.ne.s32.totalorder %s136, %s137
    %p146 = scmp.eq.s32.totalorder %s21, 0
    %p147 = por %p145, %p146
    %p148 = scmp.ne.s32.totalorder %s136, %s137
    %p149 = scmp.eq.s32.totalorder %s22, 1
    %p150 = por %p148, %p149
    %p152 = scmp.ne.s32.totalorder %s137, %s151
    %p153 = scmp.eq.s32.totalorder %s22, 0
    %p154 = por %p152, %p153
    %s156 = sadd.s32 %s155, 1
    %p159 = scmp.eq.s32.totalorder %s16, 1
    %p160 = scmp.ne.s32.totalorder %s155, %s157
    %p161 = scmp.eq.s32.totalorder %s16, 0
    %p162 = por %p160, %p161
    %p163 = scmp.ne.s32.totalorder %s155, %s157
    %p164 = scmp.eq.s32.totalorder %s21, 1
    %p165 = por %p163, %p164
    %p166 = scmp.ne.s32.totalorder %s157, %s158
    %p167 = scmp.eq.s32.totalorder %s21, 0
    %p168 = por %p166, %p167
    %p169 = scmp.ne.s32.totalorder %s157, %s158
    %p170 = scmp.eq.s32.totalorder %s22, 1
    %p171 = por %p169, %p170
    %p173 = scmp.ne.s32.totalorder %s158, %s172
    %p174 = scmp.eq.s32.totalorder %s22, 0
    %p175 = por %p173, %p174
    %s177 = sadd.s32 %s176, 1
    %p180 = scmp.eq.s32.totalorder %s16, 1
    %p181 = scmp.ne.s32.totalorder %s176, %s178
    %p182 = scmp.eq.s32.totalorder %s16, 0
    %p183 = por %p181, %p182
    %p184 = scmp.ne.s32.totalorder %s176, %s178
    %p185 = scmp.eq.s32.totalorder %s21, 1
    %p186 = por %p184, %p185
    %p187 = scmp.ne.s32.totalorder %s178, %s179
    %p188 = scmp.eq.s32.totalorder %s21, 0
    %p189 = por %p187, %p188
    %p190 = scmp.ne.s32.totalorder %s178, %s179
    %p191 = scmp.eq.s32.totalorder %s22, 1
    %p192 = por %p190, %p191
    %p194 = scmp.ne.s32.totalorder %s179, %s193
    %p195 = scmp.eq.s32.totalorder %s22, 0
    %p196 = por %p194, %p195
    %s198 = sadd.s32 %s197, 1
    %p201 = scmp.eq.s32.totalorder %s16, 1
    %p202 = scmp.ne.s32.totalorder %s197, %s199
    %p203 = scmp.eq.s32.totalorder %s16, 0
    %p204 = por %p202, %p203
    %p205 = scmp.ne.s32.totalorder %s197, %s199
    %p206 = scmp.eq.s32.totalorder %s21, 1
    %p207 = por %p205, %p206
    %p208 = scmp.ne.s32.totalorder %s199, %s200
    %p209 = scmp.eq.s32.totalorder %s21, 0
    %p210 = por %p208, %p209
    %p211 = scmp.ne.s32.totalorder %s199, %s200
    %p212 = scmp.eq.s32.totalorder %s22, 1
    %p213 = por %p211, %p212
    %p215 = scmp.ne.s32.totalorder %s200, %s214
    %p216 = scmp.eq.s32.totalorder %s22, 0
    %p217 = por %p215, %p216
    %s219 = sadd.s32 %s218, 1
    %p222 = scmp.eq.s32.totalorder %s16, 1
    %p223 = scmp.ne.s32.totalorder %s218, %s220
    %p224 = scmp.eq.s32.totalorder %s16, 0
    %p225 = por %p223, %p224
    %p226 = scmp.ne.s32.totalorder %s218, %s220
    %p227 = scmp.eq.s32.totalorder %s21, 1
    %p228 = por %p226, %p227
    %p229 = scmp.ne.s32.totalorder %s220, %s221
    %p230 = scmp.eq.s32.totalorder %s21, 0
    %p231 = por %p229, %p230
    %p232 = scmp.ne.s32.totalorder %s220, %s221
    %p233 = scmp.eq.s32.totalorder %s22, 1
    %p234 = por %p232, %p233
    %p236 = scmp.ne.s32.totalorder %s221, %s235
    %p237 = scmp.eq.s32.totalorder %s22, 0
    %p238 = por %p236, %p237
    %s239 = ssub.s32 %s16, %s23
    %p240 = scmp.eq.s32.totalorder %s239, 0
    %s242 = sadd.s32 %s241, 1
    %s243 = scalar_select %p240, %s241, %s242
    %p246 = pneg %p240
    %p247 = scmp.eq.s32.totalorder %s16, 1
    %p248 = por %p246, %p247
    %p249 = scmp.ne.s32.totalorder %s241, %s244
    %p250 = scmp.eq.s32.totalorder %s16, 0
    %p251 = por %p249, %p250
    %p252 = scmp.ne.s32.totalorder %s241, %s244
    %p253 = scmp.eq.s32.totalorder %s21, 1
    %p254 = por %p252, %p253
    %p255 = scmp.ne.s32.totalorder %s244, %s245
    %p256 = scmp.eq.s32.totalorder %s21, 0
    %p257 = por %p255, %p256
    %p258 = scmp.ne.s32.totalorder %s244, %s245
    %p259 = scmp.eq.s32.totalorder %s22, 1
    %p260 = por %p258, %p259
    %p262 = scmp.ne.s32.totalorder %s245, %s261
    %p263 = scmp.eq.s32.totalorder %s22, 0
    %p264 = por %p262, %p263
    %p265 = scmp.le.s32.totalorder 1, %s16
    %p266 = scmp.lt.s32.totalorder %s16, 3
    %p267 = pnand %p265, %p266
    %p268 = pneg %p267
    // Predicated region
    $region9: #{inception_m_pallas.1} parent=5 // pred_check
      _
    $region10: #{inception_m_pallas.1} parent=5 // pred_check_branch
      %270 = sbr.rel (%p267) target = $region12
    $region11: #{inception_m_pallas.1} parent=5 // pred_region
      %s271 = ssub.s32 %s16, 1
      // Predicated region
      $region13: #{inception_m_pallas.1} parent=11 // pred_check
        %p272 = pneg %p63
      $region14: #{inception_m_pallas.1} parent=11 // pred_check_branch
        %274 = sbr.rel (%p272) target = $region16
      $region15: #{inception_m_pallas.1} parent=11 // pred_region
        _
      $region16: #{inception_m_pallas.1} parent=11 // pred_fallthru
        _
      // Predicated region
      $region17: #{inception_m_pallas.1} parent=11 // pred_check
        %p275 = pneg %p84
      $region18: #{inception_m_pallas.1} parent=11 // pred_check_branch
        %277 = sbr.rel (%p275) target = $region20
      $region19: #{inception_m_pallas.1} parent=11 // pred_region
        _
      $region20: #{inception_m_pallas.1} parent=11 // pred_fallthru
        _
      // Predicated region
      $region21: #{inception_m_pallas.1} parent=11 // pred_check
        %p278 = pneg %p105
      $region22: #{inception_m_pallas.1} parent=11 // pred_check_branch
        %280 = sbr.rel (%p278) target = $region24
      $region23: #{inception_m_pallas.1} parent=11 // pred_region
        _
      $region24: #{inception_m_pallas.1} parent=11 // pred_fallthru
        _
      // Predicated region
      $region25: #{inception_m_pallas.1} parent=11 // pred_check
        %p281 = pneg %p126
      $region26: #{inception_m_pallas.1} parent=11 // pred_check_branch
        %283 = sbr.rel (%p281) target = $region28
      $region27: #{inception_m_pallas.1} parent=11 // pred_region
        _
      $region28: #{inception_m_pallas.1} parent=11 // pred_fallthru
        _
      // Predicated region
      $region29: #{inception_m_pallas.1} parent=11 // pred_check
        %p284 = pneg %p147
      $region30: #{inception_m_pallas.1} parent=11 // pred_check_branch
        %286 = sbr.rel (%p284) target = $region32
      $region31: #{inception_m_pallas.1} parent=11 // pred_region
        _
      $region32: #{inception_m_pallas.1} parent=11 // pred_fallthru
        _
      // Predicated region
      $region33: #{inception_m_pallas.1} parent=11 // pred_check
        %p287 = pneg %p168
      $region34: #{inception_m_pallas.1} parent=11 // pred_check_branch
        %289 = sbr.rel (%p287) target = $region36
      $region35: #{inception_m_pallas.1} parent=11 // pred_region
        _
      $region36: #{inception_m_pallas.1} parent=11 // pred_fallthru
        _
      // Predicated region
      $region37: #{inception_m_pallas.1} parent=11 // pred_check
        %p290 = pneg %p189
      $region38: #{inception_m_pallas.1} parent=11 // pred_check_branch
        %292 = sbr.rel (%p290) target = $region40
      $region39: #{inception_m_pallas.1} parent=11 // pred_region
        _
      $region40: #{inception_m_pallas.1} parent=11 // pred_fallthru
        _
      // Predicated region
      $region41: #{inception_m_pallas.1} parent=11 // pred_check
        %p293 = pneg %p210
      $region42: #{inception_m_pallas.1} parent=11 // pred_check_branch
        %295 = sbr.rel (%p293) target = $region44
      $region43: #{inception_m_pallas.1} parent=11 // pred_region
        _
      $region44: #{inception_m_pallas.1} parent=11 // pred_fallthru
        _
      // Predicated region
      $region45: #{inception_m_pallas.1} parent=11 // pred_check
        %p296 = pneg %p231
      $region46: #{inception_m_pallas.1} parent=11 // pred_check_branch
        %298 = sbr.rel (%p296) target = $region48
      $region47: #{inception_m_pallas.1} parent=11 // pred_region
        _
      $region48: #{inception_m_pallas.1} parent=11 // pred_fallthru
        _
    $region12: #{inception_m_pallas.1} parent=5 // pred_fallthru
      _
    %p299 = scmp.lt.s32.totalorder %s16, 2
    // Predicated region
    $region49: #{inception_m_pallas.1} parent=5 // pred_check
      %p300 = pneg %p299
    $region50: #{inception_m_pallas.1} parent=5 // pred_check_branch
      %302 = sbr.rel (%p300) target = $region52
    $region51: #{inception_m_pallas.1} parent=5 // pred_region
      // Predicated region
      $region53: #{inception_m_pallas.1} parent=51 // pred_check
        %p303 = pneg %p36
      $region54: #{inception_m_pallas.1} parent=51 // pred_check_branch
        %305 = sbr.rel (%p303) target = $region56
      $region55: #{inception_m_pallas.1} parent=51 // pred_region
        %p306 = scmp.lt.s32.totalorder %s16, 1
        %s307 = scalar_select %p306, %s16, 1
        %s308 = smul.addr %s307, 2
        %s309 = smul.addr %s308, 8
        %s310 = scalar_lea.vmem %s0, %s309
      $region56: #{inception_m_pallas.1} parent=51 // pred_fallthru
        _
    $region52: #{inception_m_pallas.1} parent=5 // pred_fallthru
      _
    %p311 = scmp.le.s32.totalorder 1, %s16
    %p312 = scmp.lt.s32.totalorder %s16, 3
    %p313 = pnand %p311, %p312
    %p314 = pneg %p313
    // Predicated region
    $region57: #{inception_m_pallas.1} parent=5 // pred_check
      _
    $region58: #{inception_m_pallas.1} parent=5 // pred_check_branch
      %316 = sbr.rel (%p313) target = $region60
    $region59: #{inception_m_pallas.1} parent=5 // pred_region
      %s317 = ssub.s32 %s16, 1
      %p318 = scmp.lt.s32.totalorder %s21, 1
      %s319 = scalar_select %p318, %s21, 1
      %s320 = smul.addr %s319, 2
      %s321 = smul.addr %s320, 8
      %s322 = scalar_lea.vmem %s0, %s321
      %p323 = pneg %p42
      %p324 = pneg %p39
      %p325 = pneg %p63
      %p326 = pneg %p60
      %p327 = pneg %p84
      %p328 = pneg %p81
      %p329 = pneg %p105
      %p330 = pneg %p102
      %p331 = pneg %p126
      %p332 = pneg %p123
      %p333 = pneg %p147
      %p334 = pneg %p144
      %p335 = pneg %p168
      %p336 = pneg %p165
      %p337 = pneg %p189
      %p338 = pneg %p186
      %p339 = pneg %p210
      %p340 = pneg %p207
      %p341 = pneg %p231
      %p342 = pneg %p228
      %p343 = pneg %p257
      %p344 = pneg %p254
      %p345 = scmp.lt.s32.totalorder %s21, 1
      %s346 = scalar_select %p345, %s21, 1
      %s347 = smul.addr %s346, 6
      %s348 = smul.addr %s347, 8
      %s349 = scalar_lea.vmem %s10, %s348
      %p350 = scmp.lt.s32.totalorder %s21, 1
      %s351 = scalar_select %p350, %s21, 1
      %s352 = smul.addr %s351, 2
      %s353 = smul.addr %s352, 8
      %s354 = scalar_lea.vmem %s0, %s353
      %p355 = scmp.lt.s32.totalorder %s21, 1
      %s356 = scalar_select %p355, %s21, 1
      %s357 = smul.addr %s356, 6
      %s358 = smul.addr %s357, 8
      %s359 = scalar_lea.vmem %s10, %s358
      %v360 = vld [vmem:[%s354] sm:$0xff]
      %v361 = vld [vmem:[%s354 + $0x8] sm:$0xff]
      %v362 = vld [vmem:[%s1] sm:$0xff]
      %v363 = vld [vmem:[%s1 + $0x8] sm:$0xff]
      %v364 = vld [vmem:[%s1 + $0x10] sm:$0xff]
      %v365 = vld [vmem:[%s1 + $0x18] sm:$0xff]
      %v366 = vld [vmem:[%s1 + $0x20] sm:$0xff]
      %v367 = vld [vmem:[%s1 + $0x28] sm:$0xff]
      %v368 = vld [vmem:[%s1 + $0x30] sm:$0xff]
      %v369 = vld [vmem:[%s1 + $0x38] sm:$0xff]
      %v370 = vld [vmem:[%s2] sm:$0x1]
      %v372 = vlaneseq
      %v373 = vshrl.u32 %v372, 7
      %v374 = vsub.s32 0, %v373
      %v375 = vrot.slane %v370, %v374
      %vm377 = vcmask 523264
      %v379 = vsel %vm377, %v360, 0
      %v382 = vsel %vm377, %v361, 0
      %384 = vmatprep.subr.mxu0 0.0
      %385 = vmatpush1.msra.mxu0 %v362
      %386 = vmatprep.subr.mxu0 0.0
      %387 = vmatpush1.msra.mxu0 %v363
      %388 = vmatprep.subr.mxu0 0.0
      %389 = vmatpush1.msra.mxu0 %v364
      %390 = vmatprep.subr.mxu0 0.0
      %391 = vmatpush1.msra.mxu0 %v365
      %392 = vmatprep.subr.mxu0 0.0
      %393 = vmatpush1.msra.mxu0 %v366
      %394 = vmatprep.subr.mxu0 0.0
      %395 = vmatpush1.msra.mxu0 %v367
      %396 = vmatprep.subr.mxu0 0.0
      %397 = vmatpush1.msra.mxu0 %v368
      %398 = vmatprep.subr.mxu0 0.0
      %399 = vmatpush1.msra.mxu0 %v369
      %400 = vmatprep.subr.mxu0 0.0
      %401 = vmatpush1.msra.mxu0 0.0
      %402 = vmatprep.subr.mxu0 0.0
      %403 = vmatpush1.msra.mxu0 0.0
      %404 = vmatprep.subr.mxu0 0.0
      %405 = vmatpush1.msra.mxu0 0.0
      %406 = vmatprep.subr.mxu0 0.0
      %407 = vmatpush1.msra.mxu0 0.0
      %408 = vmatprep.subr.mxu0 0.0
      %409 = vmatpush1.msra.mxu0 0.0
      %410 = vmatprep.subr.mxu0 0.0
      %411 = vmatpush1.msra.mxu0 0.0
      %412 = vmatprep.subr.mxu0 0.0
      %413 = vmatpush1.msra.mxu0 0.0
      %414 = vmatprep.subr.mxu0 0.0
      %415 = vmatpush1.msra.mxu0 0.0
      %416 = vmatprep.subr.mxu0 0.0
      %417 = vmatpush1.msra.mxu0 0.0
      %418 = vmatprep.subr.mxu0 0.0
      %419 = vmatpush1.msra.mxu0 0.0
      %420 = vmatprep.subr.mxu0 0.0
      %421 = vmatpush1.msra.mxu0 0.0
      %422 = vmatprep.subr.mxu0 0.0
      %423 = vmatpush1.msra.mxu0 0.0
      %424 = vmatprep.subr.mxu0 0.0
      %425 = vmatpush1.msra.mxu0 0.0
      %426 = vmatprep.subr.mxu0 0.0
      %427 = vmatpush1.msra.mxu0 0.0
      %428 = vmatprep.subr.mxu0 0.0
      %429 = vmatpush1.msra.mxu0 0.0
      %430 = vmatprep.subr.mxu0 0.0
      %431 = vmatpush1.msra.mxu0 0.0
      %432 = vmatprep.subr.mxu0 0.0
      %433 = vmatpush1.msra.mxu0 0.0
      %434 = vmatprep.subr.mxu0 0.0
      %435 = vmatpush1.msra.mxu0 0.0
      %436 = vmatprep.subr.mxu0 0.0
      %437 = vmatpush1.msra.mxu0 0.0
      %438 = vmatprep.subr.mxu0 0.0
      %439 = vmatpush1.msra.mxu0 0.0
      %440 = vmatprep.subr.mxu0 0.0
      %441 = vmatpush1.msra.mxu0 0.0
      %442 = vmatprep.subr.mxu0 0.0
      %443 = vmatpush1.msra.mxu0 0.0
      %444 = vmatprep.subr.mxu0 0.0
      %445 = vmatpush1.msra.mxu0 0.0
      %446 = vmatprep.subr.mxu0 0.0
      %447 = vmatpush1.msra.mxu0 0.0
      %448 = vmatprep.mubr.f32.mxu0 0.0
      %449 = vmatmul.mubr.f32.gmra.mrb[0].mxu0 %v379
      %v450 = vpop.f32.mrb[0].mxu0
      %v451 = vadd.f32 %v375, %v450
      %v452 = vpop.f32.mrb[0].mxu0
      %453 = vmatprep.mubr.f32.mxu0 0.0
      %454 = vmatmul.mubr.f32.gmra.mrb[0].mxu0 %v382
      %v455 = vpop.f32.mrb[0].mxu0
      %v456 = vadd.f32 %v375, %v455
      %v457 = vpop.f32.mrb[0].mxu0
      %458 = vdwg.mxu0
      %v459 = vmax.f32 %v451, 0.0
      %v460 = vmax.f32 %v456, 0.0
      %v461 = vld [vmem:[%s3] sm:$0xff]
      %v462 = vld [vmem:[%s3 + $0x8] sm:$0xff]
      %v463 = vld [vmem:[%s3 + $0x10] sm:$0xff]
      %v464 = vld [vmem:[%s3 + $0x18] sm:$0xff]
      %v465 = vld [vmem:[%s3 + $0x20] sm:$0xff]
      %v466 = vld [vmem:[%s3 + $0x28] sm:$0xff]
      %v467 = vld [vmem:[%s3 + $0x30] sm:$0xff]
      %v468 = vld [vmem:[%s3 + $0x38] sm:$0xff]
      %v470 = vsel %vm377, %v459, 0
      %v473 = vsel %vm377, %v460, 0
      %475 = vmatprep.subr.mxu0 0.0
      %476 = vmatpush1.msra.mxu0 %v461
      %477 = vmatprep.subr.mxu0 0.0
      %478 = vmatpush1.msra.mxu0 %v462
      %479 = vmatprep.subr.mxu0 0.0
      %480 = vmatpush1.msra.mxu0 %v463
      %481 = vmatprep.subr.mxu0 0.0
      %482 = vmatpush1.msra.mxu0 %v464
      %483 = vmatprep.subr.mxu0 0.0
      %484 = vmatpush1.msra.mxu0 %v465
      %485 = vmatprep.subr.mxu0 0.0
      %486 = vmatpush1.msra.mxu0 %v466
      %487 = vmatprep.subr.mxu0 0.0
      %488 = vmatpush1.msra.mxu0 %v467
      %489 = vmatprep.subr.mxu0 0.0
      %490 = vmatpush1.msra.mxu0 %v468
      %491 = vmatprep.subr.mxu0 0.0
      %492 = vmatpush1.msra.mxu0 0.0
      %493 = vmatprep.subr.mxu0 0.0
      %494 = vmatpush1.msra.mxu0 0.0
      %495 = vmatprep.subr.mxu0 0.0
      %496 = vmatpush1.msra.mxu0 0.0
      %497 = vmatprep.subr.mxu0 0.0
      %498 = vmatpush1.msra.mxu0 0.0
      %499 = vmatprep.subr.mxu0 0.0
      %500 = vmatpush1.msra.mxu0 0.0
      %501 = vmatprep.subr.mxu0 0.0
      %502 = vmatpush1.msra.mxu0 0.0
      %503 = vmatprep.subr.mxu0 0.0
      %504 = vmatpush1.msra.mxu0 0.0
      %505 = vmatprep.subr.mxu0 0.0
      %506 = vmatpush1.msra.mxu0 0.0
      %507 = vmatprep.subr.mxu0 0.0
      %508 = vmatpush1.msra.mxu0 0.0
      %509 = vmatprep.subr.mxu0 0.0
      %510 = vmatpush1.msra.mxu0 0.0
      %511 = vmatprep.subr.mxu0 0.0
      %512 = vmatpush1.msra.mxu0 0.0
      %513 = vmatprep.subr.mxu0 0.0
      %514 = vmatpush1.msra.mxu0 0.0
      %515 = vmatprep.subr.mxu0 0.0
      %516 = vmatpush1.msra.mxu0 0.0
      %517 = vmatprep.subr.mxu0 0.0
      %518 = vmatpush1.msra.mxu0 0.0
      %519 = vmatprep.subr.mxu0 0.0
      %520 = vmatpush1.msra.mxu0 0.0
      %521 = vmatprep.subr.mxu0 0.0
      %522 = vmatpush1.msra.mxu0 0.0
      %523 = vmatprep.subr.mxu0 0.0
      %524 = vmatpush1.msra.mxu0 0.0
      %525 = vmatprep.subr.mxu0 0.0
      %526 = vmatpush1.msra.mxu0 0.0
      %527 = vmatprep.subr.mxu0 0.0
      %528 = vmatpush1.msra.mxu0 0.0
      %529 = vmatprep.subr.mxu0 0.0
      %530 = vmatpush1.msra.mxu0 0.0
      %531 = vmatprep.subr.mxu0 0.0
      %532 = vmatpush1.msra.mxu0 0.0
      %533 = vmatprep.subr.mxu0 0.0
      %534 = vmatpush1.msra.mxu0 0.0
      %535 = vmatprep.subr.mxu0 0.0
      %536 = vmatpush1.msra.mxu0 0.0
      %537 = vmatprep.subr.mxu0 0.0
      %538 = vmatpush1.msra.mxu0 0.0
      %539 = vmatprep.mubr.f32.mxu0 0.0
      %540 = vmatmul.mubr.f32.gmra.mrb[0].mxu0 %v470
      %v541 = vpop.f32.mrb[0].mxu0
      %v542 = vadd.f32 0.0, %v541
      %v543 = vpop.f32.mrb[0].mxu0
      %544 = vmatprep.mubr.f32.mxu0 0.0
      %545 = vmatmul.mubr.f32.gmra.mrb[0].mxu0 %v473
      %v546 = vpop.f32.mrb[0].mxu0
      %v547 = vadd.f32 0.0, %v546
      %v548 = vpop.f32.mrb[0].mxu0
      %549 = vdwg.mxu0
      %s550 = scalar_lea.vmem %s3, 64
      %v551 = vld [vmem:[%s550] sm:$0xff]
      %v552 = vld [vmem:[%s550 + $0x8] sm:$0xff]
      %v553 = vld [vmem:[%s550 + $0x10] sm:$0xff]
      %v554 = vld [vmem:[%s550 + $0x18] sm:$0xff]
      %v555 = vld [vmem:[%s550 + $0x20] sm:$0xff]
      %v556 = vld [vmem:[%s550 + $0x28] sm:$0xff]
      %v557 = vld [vmem:[%s550 + $0x30] sm:$0xff]
      %v558 = vld [vmem:[%s550 + $0x38] sm:$0xff]
      %559 = vmatprep.subr.mxu0 0.0
      %560 = vmatpush1.msra.mxu0 %v551
      %561 = vmatprep.subr.mxu0 0.0
      %562 = vmatpush1.msra.mxu0 %v552
      %563 = vmatprep.subr.mxu0 0.0
      %564 = vmatpush1.msra.mxu0 %v553
      %565 = vmatprep.subr.mxu0 0.0
      %566 = vmatpush1.msra.mxu0 %v554
      %567 = vmatprep.subr.mxu0 0.0
      %568 = vmatpush1.msra.mxu0 %v555
      %569 = vmatprep.subr.mxu0 0.0
      %570 = vmatpush1.msra.mxu0 %v556
      %571 = vmatprep.subr.mxu0 0.0
      %572 = vmatpush1.msra.mxu0 %v557
      %573 = vmatprep.subr.mxu0 0.0
      %574 = vmatpush1.msra.mxu0 %v558
      %575 = vmatprep.subr.mxu0 0.0
      %576 = vmatpush1.msra.mxu0 0.0
      %577 = vmatprep.subr.mxu0 0.0
      %578 = vmatpush1.msra.mxu0 0.0
      %579 = vmatprep.subr.mxu0 0.0
      %580 = vmatpush1.msra.mxu0 0.0
      %581 = vmatprep.subr.mxu0 0.0
      %582 = vmatpush1.msra.mxu0 0.0
      %583 = vmatprep.subr.mxu0 0.0
      %584 = vmatpush1.msra.mxu0 0.0
      %585 = vmatprep.subr.mxu0 0.0
      %586 = vmatpush1.msra.mxu0 0.0
      %587 = vmatprep.subr.mxu0 0.0
      %588 = vmatpush1.msra.mxu0 0.0
      %589 = vmatprep.subr.mxu0 0.0
      %590 = vmatpush1.msra.mxu0 0.0
      %591 = vmatprep.subr.mxu0 0.0
      %592 = vmatpush1.msra.mxu0 0.0
      %593 = vmatprep.subr.mxu0 0.0
      %594 = vmatpush1.msra.mxu0 0.0
      %595 = vmatprep.subr.mxu0 0.0
      %596 = vmatpush1.msra.mxu0 0.0
      %597 = vmatprep.subr.mxu0 0.0
      %598 = vmatpush1.msra.mxu0 0.0
      %599 = vmatprep.subr.mxu0 0.0
      %600 = vmatpush1.msra.mxu0 0.0
      %601 = vmatprep.subr.mxu0 0.0
      %602 = vmatpush1.msra.mxu0 0.0
      %603 = vmatprep.subr.mxu0 0.0
      %604 = vmatpush1.msra.mxu0 0.0
      %605 = vmatprep.subr.mxu0 0.0
      %606 = vmatpush1.msra.mxu0 0.0
      %607 = vmatprep.subr.mxu0 0.0
      %608 = vmatpush1.msra.mxu0 0.0
      %609 = vmatprep.subr.mxu0 0.0
      %610 = vmatpush1.msra.mxu0 0.0
      %611 = vmatprep.subr.mxu0 0.0
      %612 = vmatpush1.msra.mxu0 0.0
      %613 = vmatprep.subr.mxu0 0.0
      %614 = vmatpush1.msra.mxu0 0.0
      %615 = vmatprep.subr.mxu0 0.0
      %616 = vmatpush1.msra.mxu0 0.0
      %617 = vmatprep.subr.mxu0 0.0
      %618 = vmatpush1.msra.mxu0 0.0
      %619 = vmatprep.subr.mxu0 0.0
      %620 = vmatpush1.msra.mxu0 0.0
      %621 = vmatprep.subr.mxu0 0.0
      %622 = vmatpush1.msra.mxu0 0.0
      %623 = vmatprep.mubr.f32.mxu0 0.0
      %624 = vmatmul.mubr.f32.gmra.mrb[0].mxu0 %v470
      %v625 = vpop.f32.mrb[0].mxu0
      %v626 = vadd.f32 0.0, %v625
      %v627 = vpop.f32.mrb[0].mxu0
      %628 = vmatprep.mubr.f32.mxu0 0.0
      %629 = vmatmul.mubr.f32.gmra.mrb[0].mxu0 %v473
      %v630 = vpop.f32.mrb[0].mxu0
      %v631 = vadd.f32 0.0, %v630
      %v632 = vpop.f32.mrb[0].mxu0
      %633 = vdwg.mxu0
      %s634 = scalar_lea.vmem %s3, 128
      %v635 = vld [vmem:[%s634] sm:$0xff]
      %v636 = vld [vmem:[%s634 + $0x8] sm:$0xff]
      %v637 = vld [vmem:[%s634 + $0x10] sm:$0xff]
      %v638 = vld [vmem:[%s634 + $0x18] sm:$0xff]
      %v639 = vld [vmem:[%s634 + $0x20] sm:$0xff]
      %v640 = vld [vmem:[%s634 + $0x28] sm:$0xff]
      %v641 = vld [vmem:[%s634 + $0x30] sm:$0xff]
      %v642 = vld [vmem:[%s634 + $0x38] sm:$0xff]
      %643 = vmatprep.subr.mxu0 0.0
      %644 = vmatpush1.msra.mxu0 %v635
      %645 = vmatprep.subr.mxu0 0.0
      %646 = vmatpush1.msra.mxu0 %v636
      %647 = vmatprep.subr.mxu0 0.0
      %648 = vmatpush1.msra.mxu0 %v637
      %649 = vmatprep.subr.mxu0 0.0
      %650 = vmatpush1.msra.mxu0 %v638
      %651 = vmatprep.subr.mxu0 0.0
      %652 = vmatpush1.msra.mxu0 %v639
      %653 = vmatprep.subr.mxu0 0.0
      %654 = vmatpush1.msra.mxu0 %v640
      %655 = vmatprep.subr.mxu0 0.0
      %656 = vmatpush1.msra.mxu0 %v641
      %657 = vmatprep.subr.mxu0 0.0
      %658 = vmatpush1.msra.mxu0 %v642
      %659 = vmatprep.subr.mxu0 0.0
      %660 = vmatpush1.msra.mxu0 0.0
      %661 = vmatprep.subr.mxu0 0.0
      %662 = vmatpush1.msra.mxu0 0.0
      %663 = vmatprep.subr.mxu0 0.0
      %664 = vmatpush1.msra.mxu0 0.0
      %665 = vmatprep.subr.mxu0 0.0
      %666 = vmatpush1.msra.mxu0 0.0
      %667 = vmatprep.subr.mxu0 0.0
      %668 = vmatpush1.msra.mxu0 0.0
      %669 = vmatprep.subr.mxu0 0.0
      %670 = vmatpush1.msra.mxu0 0.0
      %671 = vmatprep.subr.mxu0 0.0
      %672 = vmatpush1.msra.mxu0 0.0
      %673 = vmatprep.subr.mxu0 0.0
      %674 = vmatpush1.msra.mxu0 0.0
      %675 = vmatprep.subr.mxu0 0.0
      %676 = vmatpush1.msra.mxu0 0.0
      %677 = vmatprep.subr.mxu0 0.0
      %678 = vmatpush1.msra.mxu0 0.0
      %679 = vmatprep.subr.mxu0 0.0
      %680 = vmatpush1.msra.mxu0 0.0
      %681 = vmatprep.subr.mxu0 0.0
      %682 = vmatpush1.msra.mxu0 0.0
      %683 = vmatprep.subr.mxu0 0.0
      %684 = vmatpush1.msra.mxu0 0.0
      %685 = vmatprep.subr.mxu0 0.0
      %686 = vmatpush1.msra.mxu0 0.0
      %687 = vmatprep.subr.mxu0 0.0
      %688 = vmatpush1.msra.mxu0 0.0
      %689 = vmatprep.subr.mxu0 0.0
      %690 = vmatpush1.msra.mxu0 0.0
      %691 = vmatprep.subr.mxu0 0.0
      %692 = vmatpush1.msra.mxu0 0.0
      %693 = vmatprep.subr.mxu0 0.0
      %694 = vmatpush1.msra.mxu0 0.0
      %695 = vmatprep.subr.mxu0 0.0
      %696 = vmatpush1.msra.mxu0 0.0
      %697 = vmatprep.subr.mxu0 0.0
      %698 = vmatpush1.msra.mxu0 0.0
      %699 = vmatprep.subr.mxu0 0.0
      %700 = vmatpush1.msra.mxu0 0.0
      %701 = vmatprep.subr.mxu0 0.0
      %702 = vmatpush1.msra.mxu0 0.0
      %703 = vmatprep.subr.mxu0 0.0
      %704 = vmatpush1.msra.mxu0 0.0
      %705 = vmatprep.subr.mxu0 0.0
      %706 = vmatpush1.msra.mxu0 0.0
      %707 = vmatprep.mubr.f32.mxu0 0.0
      %708 = vmatmul.mubr.f32.gmra.mrb[0].mxu0 %v470
      %v709 = vpop.f32.mrb[0].mxu0
      %v710 = vadd.f32 0.0, %v709
      %v711 = vpop.f32.mrb[0].mxu0
      %712 = vmatprep.mubr.f32.mxu0 0.0
      %713 = vmatmul.mubr.f32.gmra.mrb[0].mxu0 %v473
      %v714 = vpop.f32.mrb[0].mxu0
      %v715 = vadd.f32 0.0, %v714
      %v716 = vpop.f32.mrb[0].mxu0
      %717 = vdwg.mxu0
      %v718 = vld [vmem:[%s5] sm:$0xff]
      %v719 = vld [vmem:[%s5 + $0x8] sm:$0x3f]
      %s720 = scalar_lea.vmem %s5, 16
      %v721 = vld [vmem:[%s720] sm:$0xff]
      %v722 = vld [vmem:[%s720 + $0x8] sm:$0x3f]
      %vm723 = vcmask 130048
      %v725 = vsel %vm723, %v721, 0
      %v728 = vsel %vm723, %v722, 0
      %730 = vmatprep.subr.mxu0 0.0
      %731 = vmatpush1.msra.mxu0 %v626
      %732 = vmatprep.subr.mxu0 0.0
      %733 = vmatpush1.msra.mxu0 %v631
      %734 = vmatprep.subr.mxu0 0.0
      %735 = vmatpush1.msra.mxu0 0.0
      %736 = vmatprep.subr.mxu0 0.0
      %737 = vmatpush1.msra.mxu0 0.0
      %738 = vmatprep.subr.mxu0 0.0
      %739 = vmatpush1.msra.mxu0 0.0
      %740 = vmatprep.subr.mxu0 0.0
      %741 = vmatpush1.msra.mxu0 0.0
      %742 = vmatprep.subr.mxu0 0.0
      %743 = vmatpush1.msra.mxu0 0.0
      %744 = vmatprep.subr.mxu0 0.0
      %745 = vmatpush1.msra.mxu0 0.0
      %746 = vmatprep.subr.mxu0 0.0
      %747 = vmatpush1.msra.mxu0 0.0
      %748 = vmatprep.subr.mxu0 0.0
      %749 = vmatpush1.msra.mxu0 0.0
      %750 = vmatprep.subr.mxu0 0.0
      %751 = vmatpush1.msra.mxu0 0.0
      %752 = vmatprep.subr.mxu0 0.0
      %753 = vmatpush1.msra.mxu0 0.0
      %754 = vmatprep.subr.mxu0 0.0
      %755 = vmatpush1.msra.mxu0 0.0
      %756 = vmatprep.subr.mxu0 0.0
      %757 = vmatpush1.msra.mxu0 0.0
      %758 = vmatprep.subr.mxu0 0.0
      %759 = vmatpush1.msra.mxu0 0.0
      %760 = vmatprep.subr.mxu0 0.0
      %761 = vmatpush1.msra.mxu0 0.0
      %762 = vmatprep.subr.mxu0 0.0
      %763 = vmatpush1.msra.mxu0 0.0
      %764 = vmatprep.subr.mxu0 0.0
      %765 = vmatpush1.msra.mxu0 0.0
      %766 = vmatprep.subr.mxu0 0.0
      %767 = vmatpush1.msra.mxu0 0.0
      %768 = vmatprep.subr.mxu0 0.0
      %769 = vmatpush1.msra.mxu0 0.0
      %770 = vmatprep.subr.mxu0 0.0
      %771 = vmatpush1.msra.mxu0 0.0
      %772 = vmatprep.subr.mxu0 0.0
      %773 = vmatpush1.msra.mxu0 0.0
      %774 = vmatprep.subr.mxu0 0.0
      %775 = vmatpush1.msra.mxu0 0.0
      %776 = vmatprep.subr.mxu0 0.0
      %777 = vmatpush1.msra.mxu0 0.0
      %778 = vmatprep.subr.mxu0 0.0
      %779 = vmatpush1.msra.mxu0 0.0
      %780 = vmatprep.subr.mxu0 0.0
      %781 = vmatpush1.msra.mxu0 0.0
      %782 = vmatprep.subr.mxu0 0.0
      %783 = vmatpush1.msra.mxu0 0.0
      %784 = vmatprep.subr.mxu0 0.0
      %785 = vmatpush1.msra.mxu0 0.0
      %786 = vmatprep.subr.mxu0 0.0
      %787 = vmatpush1.msra.mxu0 0.0
      %788 = vmatprep.subr.mxu0 0.0
      %789 = vmatpush1.msra.mxu0 0.0
      %790 = vmatprep.subr.mxu0 0.0
      %791 = vmatpush1.msra.mxu0 0.0
      %792 = vmatprep.subr.mxu0 0.0
      %793 = vmatpush1.msra.mxu0 0.0
      %794 = vmatprep.mubr.f32.mxu0 0.0
      %795 = vmatmul.mubr.f32.gmra.mrb[0].mxu0 %v725
      %v796 = vpop.f32.mrb[0].mxu0
      %v797 = vadd.f32 0.0, %v796
      %v798 = vpop.f32.mrb[0].mxu0
      %799 = vmatprep.mubr.f32.mxu0 0.0
      %800 = vmatmul.mubr.f32.gmra.mrb[0].mxu0 %v728
      %v801 = vpop.f32.mrb[0].mxu0
      %v802 = vadd.f32 0.0, %v801
      %v803 = vpop.f32.mrb[0].mxu0
      %804 = vdwg.mxu0
      %v806 = vsel %vm723, %v718, 0
      %v809 = vsel %vm723, %v719, 0
      %811 = vmatprep.subr.mxu0 0.0
      %812 = vmatpush1.msra.mxu0 %v542
      %813 = vmatprep.subr.mxu0 0.0
      %814 = vmatpush1.msra.mxu0 %v547
      %815 = vmatprep.subr.mxu0 0.0
      %816 = vmatpush1.msra.mxu0 0.0
      %817 = vmatprep.subr.mxu0 0.0
      %818 = vmatpush1.msra.mxu0 0.0
      %819 = vmatprep.subr.mxu0 0.0
      %820 = vmatpush1.msra.mxu0 0.0
      %821 = vmatprep.subr.mxu0 0.0
      %822 = vmatpush1.msra.mxu0 0.0
      %823 = vmatprep.subr.mxu0 0.0
      %824 = vmatpush1.msra.mxu0 0.0
      %825 = vmatprep.subr.mxu0 0.0
      %826 = vmatpush1.msra.mxu0 0.0
      %827 = vmatprep.subr.mxu0 0.0
      %828 = vmatpush1.msra.mxu0 0.0
      %829 = vmatprep.subr.mxu0 0.0
      %830 = vmatpush1.msra.mxu0 0.0
      %831 = vmatprep.subr.mxu0 0.0
      %832 = vmatpush1.msra.mxu0 0.0
      %833 = vmatprep.subr.mxu0 0.0
      %834 = vmatpush1.msra.mxu0 0.0
      %835 = vmatprep.subr.mxu0 0.0
      %836 = vmatpush1.msra.mxu0 0.0
      %837 = vmatprep.subr.mxu0 0.0
      %838 = vmatpush1.msra.mxu0 0.0
      %839 = vmatprep.subr.mxu0 0.0
      %840 = vmatpush1.msra.mxu0 0.0
      %841 = vmatprep.subr.mxu0 0.0
      %842 = vmatpush1.msra.mxu0 0.0
      %843 = vmatprep.subr.mxu0 0.0
      %844 = vmatpush1.msra.mxu0 0.0
      %845 = vmatprep.subr.mxu0 0.0
      %846 = vmatpush1.msra.mxu0 0.0
      %847 = vmatprep.subr.mxu0 0.0
      %848 = vmatpush1.msra.mxu0 0.0
      %849 = vmatprep.subr.mxu0 0.0
      %850 = vmatpush1.msra.mxu0 0.0
      %851 = vmatprep.subr.mxu0 0.0
      %852 = vmatpush1.msra.mxu0 0.0
      %853 = vmatprep.subr.mxu0 0.0
      %854 = vmatpush1.msra.mxu0 0.0
      %855 = vmatprep.subr.mxu0 0.0
      %856 = vmatpush1.msra.mxu0 0.0
      %857 = vmatprep.subr.mxu0 0.0
      %858 = vmatpush1.msra.mxu0 0.0
      %859 = vmatprep.subr.mxu0 0.0
      %860 = vmatpush1.msra.mxu0 0.0
      %861 = vmatprep.subr.mxu0 0.0
      %862 = vmatpush1.msra.mxu0 0.0
      %863 = vmatprep.subr.mxu0 0.0
      %864 = vmatpush1.msra.mxu0 0.0
      %865 = vmatprep.subr.mxu0 0.0
      %866 = vmatpush1.msra.mxu0 0.0
      %867 = vmatprep.subr.mxu0 0.0
      %868 = vmatpush1.msra.mxu0 0.0
      %869 = vmatprep.subr.mxu0 0.0
      %870 = vmatpush1.msra.mxu0 0.0
      %871 = vmatprep.subr.mxu0 0.0
      %872 = vmatpush1.msra.mxu0 0.0
      %873 = vmatprep.subr.mxu0 0.0
      %874 = vmatpush1.msra.mxu0 0.0
      %875 = vmatprep.mubr.f32.mxu0 0.0
      %876 = vmatmul.mubr.f32.gmra.mrb[0].mxu0 %v806
      %v877 = vpop.f32.mrb[0].mxu0
      %v878 = vadd.f32 %v797, %v877
      %v879 = vpop.f32.mrb[0].mxu0
      %880 = vmatprep.mubr.f32.mxu0 0.0
      %881 = vmatmul.mubr.f32.gmra.mrb[0].mxu0 %v809
      %v882 = vpop.f32.mrb[0].mxu0
      %v883 = vadd.f32 %v802, %v882
      %v884 = vpop.f32.mrb[0].mxu0
      %885 = vdwg.mxu0
      %s886 = scalar_lea.vmem %s5, 32
      %v887 = vld [vmem:[%s886] sm:$0xff]
      %v888 = vld [vmem:[%s886 + $0x8] sm:$0x3f]
      %v890 = vsel %vm723, %v887, 0
      %v893 = vsel %vm723, %v888, 0
      %895 = vmatprep.subr.mxu0 0.0
      %896 = vmatpush1.msra.mxu0 %v710
      %897 = vmatprep.subr.mxu0 0.0
      %898 = vmatpush1.msra.mxu0 %v715
      %899 = vmatprep.subr.mxu0 0.0
      %900 = vmatpush1.msra.mxu0 0.0
      %901 = vmatprep.subr.mxu0 0.0
      %902 = vmatpush1.msra.mxu0 0.0
      %903 = vmatprep.subr.mxu0 0.0
      %904 = vmatpush1.msra.mxu0 0.0
      %905 = vmatprep.subr.mxu0 0.0
      %906 = vmatpush1.msra.mxu0 0.0
      %907 = vmatprep.subr.mxu0 0.0
      %908 = vmatpush1.msra.mxu0 0.0
      %909 = vmatprep.subr.mxu0 0.0
      %910 = vmatpush1.msra.mxu0 0.0
      %911 = vmatprep.subr.mxu0 0.0
      %912 = vmatpush1.msra.mxu0 0.0
      %913 = vmatprep.subr.mxu0 0.0
      %914 = vmatpush1.msra.mxu0 0.0
      %915 = vmatprep.subr.mxu0 0.0
      %916 = vmatpush1.msra.mxu0 0.0
      %917 = vmatprep.subr.mxu0 0.0
      %918 = vmatpush1.msra.mxu0 0.0
      %919 = vmatprep.subr.mxu0 0.0
      %920 = vmatpush1.msra.mxu0 0.0
      %921 = vmatprep.subr.mxu0 0.0
      %922 = vmatpush1.msra.mxu0 0.0
      %923 = vmatprep.subr.mxu0 0.0
      %924 = vmatpush1.msra.mxu0 0.0
      %925 = vmatprep.subr.mxu0 0.0
      %926 = vmatpush1.msra.mxu0 0.0
      %927 = vmatprep.subr.mxu0 0.0
      %928 = vmatpush1.msra.mxu0 0.0
      %929 = vmatprep.subr.mxu0 0.0
      %930 = vmatpush1.msra.mxu0 0.0
      %931 = vmatprep.subr.mxu0 0.0
      %932 = vmatpush1.msra.mxu0 0.0
      %933 = vmatprep.subr.mxu0 0.0
      %934 = vmatpush1.msra.mxu0 0.0
      %935 = vmatprep.subr.mxu0 0.0
      %936 = vmatpush1.msra.mxu0 0.0
      %937 = vmatprep.subr.mxu0 0.0
      %938 = vmatpush1.msra.mxu0 0.0
      %939 = vmatprep.subr.mxu0 0.0
      %940 = vmatpush1.msra.mxu0 0.0
      %941 = vmatprep.subr.mxu0 0.0
      %942 = vmatpush1.msra.mxu0 0.0
      %943 = vmatprep.subr.mxu0 0.0
      %944 = vmatpush1.msra.mxu0 0.0
      %945 = vmatprep.subr.mxu0 0.0
      %946 = vmatpush1.msra.mxu0 0.0
      %947 = vmatprep.subr.mxu0 0.0
      %948 = vmatpush1.msra.mxu0 0.0
      %949 = vmatprep.subr.mxu0 0.0
      %950 = vmatpush1.msra.mxu0 0.0
      %951 = vmatprep.subr.mxu0 0.0
      %952 = vmatpush1.msra.mxu0 0.0
      %953 = vmatprep.subr.mxu0 0.0
      %954 = vmatpush1.msra.mxu0 0.0
      %955 = vmatprep.subr.mxu0 0.0
      %956 = vmatpush1.msra.mxu0 0.0
      %957 = vmatprep.subr.mxu0 0.0
      %958 = vmatpush1.msra.mxu0 0.0
      %959 = vmatprep.mubr.f32.mxu0 0.0
      %960 = vmatmul.mubr.f32.gmra.mrb[0].mxu0 %v890
      %v961 = vpop.f32.mrb[0].mxu0
      %v962 = vadd.f32 0.0, %v961
      %v963 = vpop.f32.mrb[0].mxu0
      %964 = vmatprep.mubr.f32.mxu0 0.0
      %965 = vmatmul.mubr.f32.gmra.mrb[0].mxu0 %v893
      %v966 = vpop.f32.mrb[0].mxu0
      %v967 = vadd.f32 0.0, %v966
      %v968 = vpop.f32.mrb[0].mxu0
      %969 = vdwg.mxu0
      %v970 = vadd.f32 %v878, %v962
      %v971 = vadd.f32 %v883, %v967
      %v972 = vld [vmem:[%s4] sm:$0x1]
      %v974 = vlaneseq
      %v975 = vshrl.u32 %v974, 7
      %v976 = vsub.s32 0, %v975
      %v977 = vrot.slane %v972, %v976
      %v979 = vadd.f32 %v970, %v977
      %v980 = vadd.f32 %v971, %v977
      %v981 = vmax.f32 %v979, 0.0
      %v982 = vmax.f32 %v980, 0.0
      %v983 = vld [vmem:[%s6] sm:$0xff]
      %v984 = vld [vmem:[%s6 + $0x8] sm:$0x3f]
      %v986 = vsel %vm723, %v983, 0
      %v989 = vsel %vm723, %v984, 0
      %991 = vmatprep.subr.mxu0 0.0
      %992 = vmatpush1.msra.mxu0 %v360
      %993 = vmatprep.subr.mxu0 0.0
      %994 = vmatpush1.msra.mxu0 %v361
      %995 = vmatprep.subr.mxu0 0.0
      %996 = vmatpush1.msra.mxu0 0.0
      %997 = vmatprep.subr.mxu0 0.0
      %998 = vmatpush1.msra.mxu0 0.0
      %999 = vmatprep.subr.mxu0 0.0
      %1000 = vmatpush1.msra.mxu0 0.0
      %1001 = vmatprep.subr.mxu0 0.0
      %1002 = vmatpush1.msra.mxu0 0.0
      %1003 = vmatprep.subr.mxu0 0.0
      %1004 = vmatpush1.msra.mxu0 0.0
      %1005 = vmatprep.subr.mxu0 0.0
      %1006 = vmatpush1.msra.mxu0 0.0
      %1007 = vmatprep.subr.mxu0 0.0
      %1008 = vmatpush1.msra.mxu0 0.0
      %1009 = vmatprep.subr.mxu0 0.0
      %1010 = vmatpush1.msra.mxu0 0.0
      %1011 = vmatprep.subr.mxu0 0.0
      %1012 = vmatpush1.msra.mxu0 0.0
      %1013 = vmatprep.subr.mxu0 0.0
      %1014 = vmatpush1.msra.mxu0 0.0
      %1015 = vmatprep.subr.mxu0 0.0
      %1016 = vmatpush1.msra.mxu0 0.0
      %1017 = vmatprep.subr.mxu0 0.0
      %1018 = vmatpush1.msra.mxu0 0.0
      %1019 = vmatprep.subr.mxu0 0.0
      %1020 = vmatpush1.msra.mxu0 0.0
      %1021 = vmatprep.subr.mxu0 0.0
      %1022 = vmatpush1.msra.mxu0 0.0
      %1023 = vmatprep.subr.mxu0 0.0
      %1024 = vmatpush1.msra.mxu0 0.0
      %1025 = vmatprep.subr.mxu0 0.0
      %1026 = vmatpush1.msra.mxu0 0.0
      %1027 = vmatprep.subr.mxu0 0.0
      %1028 = vmatpush1.msra.mxu0 0.0
      %1029 = vmatprep.subr.mxu0 0.0
      %1030 = vmatpush1.msra.mxu0 0.0
      %1031 = vmatprep.subr.mxu0 0.0
      %1032 = vmatpush1.msra.mxu0 0.0
      %1033 = vmatprep.subr.mxu0 0.0
      %1034 = vmatpush1.msra.mxu0 0.0
      %1035 = vmatprep.subr.mxu0 0.0
      %1036 = vmatpush1.msra.mxu0 0.0
      %1037 = vmatprep.subr.mxu0 0.0
      %1038 = vmatpush1.msra.mxu0 0.0
      %1039 = vmatprep.subr.mxu0 0.0
      %1040 = vmatpush1.msra.mxu0 0.0
      %1041 = vmatprep.subr.mxu0 0.0
      %1042 = vmatpush1.msra.mxu0 0.0
      %1043 = vmatprep.subr.mxu0 0.0
      %1044 = vmatpush1.msra.mxu0 0.0
      %1045 = vmatprep.subr.mxu0 0.0
      %1046 = vmatpush1.msra.mxu0 0.0
      %1047 = vmatprep.subr.mxu0 0.0
      %1048 = vmatpush1.msra.mxu0 0.0
      %1049 = vmatprep.subr.mxu0 0.0
      %1050 = vmatpush1.msra.mxu0 0.0
      %1051 = vmatprep.subr.mxu0 0.0
      %1052 = vmatpush1.msra.mxu0 0.0
      %1053 = vmatprep.subr.mxu0 0.0
      %1054 = vmatpush1.msra.mxu0 0.0
      %1055 = vmatprep.mubr.f32.mxu0 0.0
      %1056 = vmatmul.mubr.f32.gmra.mrb[0].mxu0 %v986
      %v1057 = vpop.f32.mrb[0].mxu0
      %v1058 = vadd.f32 0.0, %v1057
      %v1059 = vpop.f32.mrb[0].mxu0
      %1060 = vmatprep.mubr.f32.mxu0 0.0
      %1061 = vmatmul.mubr.f32.gmra.mrb[0].mxu0 %v989
      %v1062 = vpop.f32.mrb[0].mxu0
      %v1063 = vadd.f32 0.0, %v1062
      %v1064 = vpop.f32.mrb[0].mxu0
      %1065 = vdwg.mxu0
      %v1066 = vld [vmem:[%s7] sm:$0xff]
      %v1067 = vld [vmem:[%s7 + $0x8] sm:$0xff]
      %v1068 = vld [vmem:[%s7 + $0x10] sm:$0xff]
      %v1069 = vld [vmem:[%s7 + $0x18] sm:$0xff]
      %v1070 = vld [vmem:[%s7 + $0x20] sm:$0xff]
      %v1071 = vld [vmem:[%s7 + $0x28] sm:$0xff]
      %v1072 = vld [vmem:[%s7 + $0x30] sm:$0xff]
      %v1073 = vld [vmem:[%s7 + $0x38] sm:$0xff]
      %v1074 = vld [vmem:[%s7 + $0x40] sm:$0xff]
      %v1075 = vld [vmem:[%s7 + $0x48] sm:$0xff]
      %v1076 = vld [vmem:[%s7 + $0x50] sm:$0xff]
      %v1077 = vld [vmem:[%s7 + $0x58] sm:$0xff]
      %v1078 = vld [vmem:[%s7 + $0x60] sm:$0xff]
      %v1079 = vld [vmem:[%s7 + $0x68] sm:$0xff]
      %v1080 = vld [vmem:[%s7 + $0x70] sm:$0xff]
      %v1081 = vld [vmem:[%s7 + $0x78] sm:$0xff]
      %v1082 = vld [vmem:[%s7 + $0x80] sm:$0xff]
      %v1083 = vld [vmem:[%s7 + $0x88] sm:$0xff]
      %v1084 = vld [vmem:[%s7 + $0x90] sm:$0xff]
      %v1085 = vld [vmem:[%s7 + $0x98] sm:$0xff]
      %v1086 = vld [vmem:[%s7 + $0xa0] sm:$0xff]
      %v1087 = vld [vmem:[%s7 + $0xa8] sm:$0xff]
      %v1088 = vld [vmem:[%s7 + $0xb0] sm:$0xff]
      %v1089 = vld [vmem:[%s7 + $0xb8] sm:$0xff]
      %v1090 = vld [vmem:[%s8] sm:$0xff]
      %v1091 = vld [vmem:[%s8 + $0x8] sm:$0xff]
      %v1092 = vld [vmem:[%s8 + $0x10] sm:$0xff]
      %v1093 = vld [vmem:[%s8 + $0x18] sm:$0xff]
      %v1094 = vld [vmem:[%s8 + $0x20] sm:$0xff]
      %v1095 = vld [vmem:[%s8 + $0x28] sm:$0xff]
      %v1096 = vld [vmem:[%s8 + $0x30] sm:$0xff]
      %v1097 = vld [vmem:[%s8 + $0x38] sm:$0xff]
      %v1098 = vld [vmem:[%s8 + $0x40] sm:$0xff]
      %v1099 = vld [vmem:[%s8 + $0x48] sm:$0xff]
      %v1100 = vld [vmem:[%s8 + $0x50] sm:$0xff]
      %v1101 = vld [vmem:[%s8 + $0x58] sm:$0xff]
      %v1102 = vld [vmem:[%s8 + $0x60] sm:$0xff]
      %v1103 = vld [vmem:[%s8 + $0x68] sm:$0xff]
      %v1104 = vld [vmem:[%s8 + $0x70] sm:$0xff]
      %v1105 = vld [vmem:[%s8 + $0x78] sm:$0xff]
      %v1106 = vld [vmem:[%s8 + $0x80] sm:$0xff]
      %v1107 = vld [vmem:[%s8 + $0x88] sm:$0xff]
      %v1108 = vld [vmem:[%s8 + $0x90] sm:$0xff]
      %v1109 = vld [vmem:[%s8 + $0x98] sm:$0xff]
      %v1110 = vld [vmem:[%s8 + $0xa0] sm:$0xff]
      %v1111 = vld [vmem:[%s8 + $0xa8] sm:$0xff]
      %v1112 = vld [vmem:[%s8 + $0xb0] sm:$0xff]
      %v1113 = vld [vmem:[%s8 + $0xb8] sm:$0xff]
      %v1115 = vsel %vm377, %v1058, 0
      %v1118 = vsel %vm377, %v1063, 0
      %1120 = vmatprep.subr.mxu0 %v1091
      %1121 = vmatpush1.msra.mxu0 %v1090
      %1122 = vmatprep.subr.mxu0 %v1094
      %1123 = vmatpush1.msra.mxu0 %v1093
      %1124 = vmatprep.subr.mxu0 %v1097
      %1125 = vmatpush1.msra.mxu0 %v1096
      %1126 = vmatprep.subr.mxu0 %v1100
      %1127 = vmatpush1.msra.mxu0 %v1099
      %1128 = vmatprep.subr.mxu0 %v1103
      %1129 = vmatpush1.msra.mxu0 %v1102
      %1130 = vmatprep.subr.mxu0 %v1106
      %1131 = vmatpush1.msra.mxu0 %v1105
      %1132 = vmatprep.subr.mxu0 %v1109
      %1133 = vmatpush1.msra.mxu0 %v1108
      %1134 = vmatprep.subr.mxu0 %v1112
      %1135 = vmatpush1.msra.mxu0 %v1111
      %1136 = vmatprep.subr.mxu0 0.0
      %1137 = vmatpush1.msra.mxu0 0.0
      %1138 = vmatprep.subr.mxu0 0.0
      %1139 = vmatpush1.msra.mxu0 0.0
      %1140 = vmatprep.subr.mxu0 0.0
      %1141 = vmatpush1.msra.mxu0 0.0
      %1142 = vmatprep.subr.mxu0 0.0
      %1143 = vmatpush1.msra.mxu0 0.0
      %1144 = vmatprep.subr.mxu0 0.0
      %1145 = vmatpush1.msra.mxu0 0.0
      %1146 = vmatprep.subr.mxu0 0.0
      %1147 = vmatpush1.msra.mxu0 0.0
      %1148 = vmatprep.subr.mxu0 0.0
      %1149 = vmatpush1.msra.mxu0 0.0
      %1150 = vmatprep.subr.mxu0 0.0
      %1151 = vmatpush1.msra.mxu0 0.0
      %1152 = vmatprep.subr.mxu0 0.0
      %1153 = vmatpush1.msra.mxu0 0.0
      %1154 = vmatprep.subr.mxu0 0.0
      %1155 = vmatpush1.msra.mxu0 0.0
      %1156 = vmatprep.subr.mxu0 0.0
      %1157 = vmatpush1.msra.mxu0 0.0
      %1158 = vmatprep.subr.mxu0 0.0
      %1159 = vmatpush1.msra.mxu0 0.0
      %1160 = vmatprep.subr.mxu0 0.0
      %1161 = vmatpush1.msra.mxu0 0.0
      %1162 = vmatprep.subr.mxu0 0.0
      %1163 = vmatpush1.msra.mxu0 0.0
      %1164 = vmatprep.subr.mxu0 0.0
      %1165 = vmatpush1.msra.mxu0 0.0
      %1166 = vmatprep.subr.mxu0 0.0
      %1167 = vmatpush1.msra.mxu0 0.0
      %1168 = vmatprep.subr.mxu0 0.0
      %1169 = vmatpush1.msra.mxu0 0.0
      %1170 = vmatprep.subr.mxu0 0.0
      %1171 = vmatpush1.msra.mxu0 0.0
      %1172 = vmatprep.subr.mxu0 0.0
      %1173 = vmatpush1.msra.mxu0 0.0
      %1174 = vmatprep.subr.mxu0 0.0
      %1175 = vmatpush1.msra.mxu0 0.0
      %1176 = vmatprep.subr.mxu0 0.0
      %1177 = vmatpush1.msra.mxu0 0.0
      %1178 = vmatprep.subr.mxu0 0.0
      %1179 = vmatpush1.msra.mxu0 0.0
      %1180 = vmatprep.subr.mxu0 0.0
      %1181 = vmatpush1.msra.mxu0 0.0
      %1182 = vmatprep.subr.mxu0 0.0
      %1183 = vmatpush1.msra.mxu0 0.0
      %1184 = vmatprep.mubr.f32.mxu0 0.0
      %1185 = vmatmul.mubr.f32.gmra.mrb[0].mxu0 %v1115
      %v1186 = vpop.f32.mrb[0].mxu0
      %v1187 = vadd.f32 0.0, %v1186
      %v1188 = vpop.f32.mrb[0].mxu0
      %v1189 = vadd.f32 0.0, %v1188
      %1190 = vmatprep.mubr.f32.mxu0 0.0
      %1191 = vmatmul.mubr.f32.gmra.mrb[0].mxu0 %v1118
      %v1192 = vpop.f32.mrb[0].mxu0
      %v1193 = vadd.f32 0.0, %v1192
      %v1194 = vpop.f32.mrb[0].mxu0
      %v1195 = vadd.f32 0.0, %v1194
      %1196 = vdwg.mxu0
      %1197 = vmatprep.subr.mxu0 0.0
      %1198 = vmatpush1.msra.mxu0 %v1092
      %1199 = vmatprep.subr.mxu0 0.0
      %1200 = vmatpush1.msra.mxu0 %v1095
      %1201 = vmatprep.subr.mxu0 0.0
      %1202 = vmatpush1.msra.mxu0 %v1098
      %1203 = vmatprep.subr.mxu0 0.0
      %1204 = vmatpush1.msra.mxu0 %v1101
      %1205 = vmatprep.subr.mxu0 0.0
      %1206 = vmatpush1.msra.mxu0 %v1104
      %1207 = vmatprep.subr.mxu0 0.0
      %1208 = vmatpush1.msra.mxu0 %v1107
      %1209 = vmatprep.subr.mxu0 0.0
      %1210 = vmatpush1.msra.mxu0 %v1110
      %1211 = vmatprep.subr.mxu0 0.0
      %1212 = vmatpush1.msra.mxu0 %v1113
      %1213 = vmatprep.subr.mxu0 0.0
      %1214 = vmatpush1.msra.mxu0 0.0
      %1215 = vmatprep.subr.mxu0 0.0
      %1216 = vmatpush1.msra.mxu0 0.0
      %1217 = vmatprep.subr.mxu0 0.0
      %1218 = vmatpush1.msra.mxu0 0.0
      %1219 = vmatprep.subr.mxu0 0.0
      %1220 = vmatpush1.msra.mxu0 0.0
      %1221 = vmatprep.subr.mxu0 0.0
      %1222 = vmatpush1.msra.mxu0 0.0
      %1223 = vmatprep.subr.mxu0 0.0
      %1224 = vmatpush1.msra.mxu0 0.0
      %1225 = vmatprep.subr.mxu0 0.0
      %1226 = vmatpush1.msra.mxu0 0.0
      %1227 = vmatprep.subr.mxu0 0.0
      %1228 = vmatpush1.msra.mxu0 0.0
      %1229 = vmatprep.subr.mxu0 0.0
      %1230 = vmatpush1.msra.mxu0 0.0
      %1231 = vmatprep.subr.mxu0 0.0
      %1232 = vmatpush1.msra.mxu0 0.0
      %1233 = vmatprep.subr.mxu0 0.0
      %1234 = vmatpush1.msra.mxu0 0.0
      %1235 = vmatprep.subr.mxu0 0.0
      %1236 = vmatpush1.msra.mxu0 0.0
      %1237 = vmatprep.subr.mxu0 0.0
      %1238 = vmatpush1.msra.mxu0 0.0
      %1239 = vmatprep.subr.mxu0 0.0
      %1240 = vmatpush1.msra.mxu0 0.0
      %1241 = vmatprep.subr.mxu0 0.0
      %1242 = vmatpush1.msra.mxu0 0.0
      %1243 = vmatprep.subr.mxu0 0.0
      %1244 = vmatpush1.msra.mxu0 0.0
      %1245 = vmatprep.subr.mxu0 0.0
      %1246 = vmatpush1.msra.mxu0 0.0
      %1247 = vmatprep.subr.mxu0 0.0
      %1248 = vmatpush1.msra.mxu0 0.0
      %1249 = vmatprep.subr.mxu0 0.0
      %1250 = vmatpush1.msra.mxu0 0.0
      %1251 = vmatprep.subr.mxu0 0.0
      %1252 = vmatpush1.msra.mxu0 0.0
      %1253 = vmatprep.subr.mxu0 0.0
      %1254 = vmatpush1.msra.mxu0 0.0
      %1255 = vmatprep.subr.mxu0 0.0
      %1256 = vmatpush1.msra.mxu0 0.0
      %1257 = vmatprep.subr.mxu0 0.0
      %1258 = vmatpush1.msra.mxu0 0.0
      %1259 = vmatprep.subr.mxu0 0.0
      %1260 = vmatpush1.msra.mxu0 0.0
      %1261 = vmatprep.mubr.f32.mxu0 0.0
      %1262 = vmatmul.mubr.f32.gmra.mrb[0].mxu0 %v1115
      %v1263 = vpop.f32.mrb[0].mxu0
      %v1264 = vadd.f32 0.0, %v1263
      %v1265 = vpop.f32.mrb[0].mxu0
      %1266 = vmatprep.mubr.f32.mxu0 0.0
      %1267 = vmatmul.mubr.f32.gmra.mrb[0].mxu0 %v1118
      %v1268 = vpop.f32.mrb[0].mxu0
      %v1269 = vadd.f32 0.0, %v1268
      %v1270 = vpop.f32.mrb[0].mxu0
      %1271 = vdwg.mxu0
      %v1273 = vsel %vm377, %v981, 0
      %v1276 = vsel %vm377, %v982, 0
      %1278 = vmatprep.subr.mxu0 %v1067
      %1279 = vmatpush1.msra.mxu0 %v1066
      %1280 = vmatprep.subr.mxu0 %v1070
      %1281 = vmatpush1.msra.mxu0 %v1069
      %1282 = vmatprep.subr.mxu0 %v1073
      %1283 = vmatpush1.msra.mxu0 %v1072
      %1284 = vmatprep.subr.mxu0 %v1076
      %1285 = vmatpush1.msra.mxu0 %v1075
      %1286 = vmatprep.subr.mxu0 %v1079
      %1287 = vmatpush1.msra.mxu0 %v1078
      %1288 = vmatprep.subr.mxu0 %v1082
      %1289 = vmatpush1.msra.mxu0 %v1081
      %1290 = vmatprep.subr.mxu0 %v1085
      %1291 = vmatpush1.msra.mxu0 %v1084
      %1292 = vmatprep.subr.mxu0 %v1088
      %1293 = vmatpush1.msra.mxu0 %v1087
      %1294 = vmatprep.subr.mxu0 0.0
      %1295 = vmatpush1.msra.mxu0 0.0
      %1296 = vmatprep.subr.mxu0 0.0
      %1297 = vmatpush1.msra.mxu0 0.0
      %1298 = vmatprep.subr.mxu0 0.0
      %1299 = vmatpush1.msra.mxu0 0.0
      %1300 = vmatprep.subr.mxu0 0.0
      %1301 = vmatpush1.msra.mxu0 0.0
      %1302 = vmatprep.subr.mxu0 0.0
      %1303 = vmatpush1.msra.mxu0 0.0
      %1304 = vmatprep.subr.mxu0 0.0
      %1305 = vmatpush1.msra.mxu0 0.0
      %1306 = vmatprep.subr.mxu0 0.0
      %1307 = vmatpush1.msra.mxu0 0.0
      %1308 = vmatprep.subr.mxu0 0.0
      %1309 = vmatpush1.msra.mxu0 0.0
      %1310 = vmatprep.subr.mxu0 0.0
      %1311 = vmatpush1.msra.mxu0 0.0
      %1312 = vmatprep.subr.mxu0 0.0
      %1313 = vmatpush1.msra.mxu0 0.0
      %1314 = vmatprep.subr.mxu0 0.0
      %1315 = vmatpush1.msra.mxu0 0.0
      %1316 = vmatprep.subr.mxu0 0.0
      %1317 = vmatpush1.msra.mxu0 0.0
      %1318 = vmatprep.subr.mxu0 0.0
      %1319 = vmatpush1.msra.mxu0 0.0
      %1320 = vmatprep.subr.mxu0 0.0
      %1321 = vmatpush1.msra.mxu0 0.0
      %1322 = vmatprep.subr.mxu0 0.0
      %1323 = vmatpush1.msra.mxu0 0.0
      %1324 = vmatprep.subr.mxu0 0.0
      %1325 = vmatpush1.msra.mxu0 0.0
      %1326 = vmatprep.subr.mxu0 0.0
      %1327 = vmatpush1.msra.mxu0 0.0
      %1328 = vmatprep.subr.mxu0 0.0
      %1329 = vmatpush1.msra.mxu0 0.0
      %1330 = vmatprep.subr.mxu0 0.0
      %1331 = vmatpush1.msra.mxu0 0.0
      %1332 = vmatprep.subr.mxu0 0.0
      %1333 = vmatpush1.msra.mxu0 0.0
      %1334 = vmatprep.subr.mxu0 0.0
      %1335 = vmatpush1.msra.mxu0 0.0
      %1336 = vmatprep.subr.mxu0 0.0
      %1337 = vmatpush1.msra.mxu0 0.0
      %1338 = vmatprep.subr.mxu0 0.0
      %1339 = vmatpush1.msra.mxu0 0.0
      %1340 = vmatprep.subr.mxu0 0.0
      %1341 = vmatpush1.msra.mxu0 0.0
      %1342 = vmatprep.mubr.f32.mxu0 0.0
      %1343 = vmatmul.mubr.f32.gmra.mrb[0].mxu0 %v1273
      %v1344 = vpop.f32.mrb[0].mxu0
      %v1345 = vadd.f32 %v1187, %v1344
      %v1346 = vpop.f32.mrb[0].mxu0
      %v1347 = vadd.f32 %v1189, %v1346
      %1348 = vmatprep.mubr.f32.mxu0 0.0
      %1349 = vmatmul.mubr.f32.gmra.mrb[0].mxu0 %v1276
      %v1350 = vpop.f32.mrb[0].mxu0
      %v1351 = vadd.f32 %v1193, %v1350
      %v1352 = vpop.f32.mrb[0].mxu0
      %v1353 = vadd.f32 %v1195, %v1352
      %1354 = vdwg.mxu0
      %1355 = vmatprep.subr.mxu0 0.0
      %1356 = vmatpush1.msra.mxu0 %v1068
      %1357 = vmatprep.subr.mxu0 0.0
      %1358 = vmatpush1.msra.mxu0 %v1071
      %1359 = vmatprep.subr.mxu0 0.0
      %1360 = vmatpush1.msra.mxu0 %v1074
      %1361 = vmatprep.subr.mxu0 0.0
      %1362 = vmatpush1.msra.mxu0 %v1077
      %1363 = vmatprep.subr.mxu0 0.0
      %1364 = vmatpush1.msra.mxu0 %v1080
      %1365 = vmatprep.subr.mxu0 0.0
      %1366 = vmatpush1.msra.mxu0 %v1083
      %1367 = vmatprep.subr.mxu0 0.0
      %1368 = vmatpush1.msra.mxu0 %v1086
      %1369 = vmatprep.subr.mxu0 0.0
      %1370 = vmatpush1.msra.mxu0 %v1089
      %1371 = vmatprep.subr.mxu0 0.0
      %1372 = vmatpush1.msra.mxu0 0.0
      %1373 = vmatprep.subr.mxu0 0.0
      %1374 = vmatpush1.msra.mxu0 0.0
      %1375 = vmatprep.subr.mxu0 0.0
      %1376 = vmatpush1.msra.mxu0 0.0
      %1377 = vmatprep.subr.mxu0 0.0
      %1378 = vmatpush1.msra.mxu0 0.0
      %1379 = vmatprep.subr.mxu0 0.0
      %1380 = vmatpush1.msra.mxu0 0.0
      %1381 = vmatprep.subr.mxu0 0.0
      %1382 = vmatpush1.msra.mxu0 0.0
      %1383 = vmatprep.subr.mxu0 0.0
      %1384 = vmatpush1.msra.mxu0 0.0
      %1385 = vmatprep.subr.mxu0 0.0
      %1386 = vmatpush1.msra.mxu0 0.0
      %1387 = vmatprep.subr.mxu0 0.0
      %1388 = vmatpush1.msra.mxu0 0.0
      %1389 = vmatprep.subr.mxu0 0.0
      %1390 = vmatpush1.msra.mxu0 0.0
      %1391 = vmatprep.subr.mxu0 0.0
      %1392 = vmatpush1.msra.mxu0 0.0
      %1393 = vmatprep.subr.mxu0 0.0
      %1394 = vmatpush1.msra.mxu0 0.0
      %1395 = vmatprep.subr.mxu0 0.0
      %1396 = vmatpush1.msra.mxu0 0.0
      %1397 = vmatprep.subr.mxu0 0.0
      %1398 = vmatpush1.msra.mxu0 0.0
      %1399 = vmatprep.subr.mxu0 0.0
      %1400 = vmatpush1.msra.mxu0 0.0
      %1401 = vmatprep.subr.mxu0 0.0
      %1402 = vmatpush1.msra.mxu0 0.0
      %1403 = vmatprep.subr.mxu0 0.0
      %1404 = vmatpush1.msra.mxu0 0.0
      %1405 = vmatprep.subr.mxu0 0.0
      %1406 = vmatpush1.msra.mxu0 0.0
      %1407 = vmatprep.subr.mxu0 0.0
      %1408 = vmatpush1.msra.mxu0 0.0
      %1409 = vmatprep.subr.mxu0 0.0
      %1410 = vmatpush1.msra.mxu0 0.0
      %1411 = vmatprep.subr.mxu0 0.0
      %1412 = vmatpush1.msra.mxu0 0.0
      %1413 = vmatprep.subr.mxu0 0.0
      %1414 = vmatpush1.msra.mxu0 0.0
      %1415 = vmatprep.subr.mxu0 0.0
      %1416 = vmatpush1.msra.mxu0 0.0
      %1417 = vmatprep.subr.mxu0 0.0
      %1418 = vmatpush1.msra.mxu0 0.0
      %1419 = vmatprep.mubr.f32.mxu0 0.0
      %1420 = vmatmul.mubr.f32.gmra.mrb[0].mxu0 %v1273
      %v1421 = vpop.f32.mrb[0].mxu0
      %v1422 = vadd.f32 %v1264, %v1421
      %v1423 = vpop.f32.mrb[0].mxu0
      %1424 = vmatprep.mubr.f32.mxu0 0.0
      %1425 = vmatmul.mubr.f32.gmra.mrb[0].mxu0 %v1276
      %v1426 = vpop.f32.mrb[0].mxu0
      %v1427 = vadd.f32 %v1269, %v1426
      %v1428 = vpop.f32.mrb[0].mxu0
      %1429 = vdwg.mxu0
      %v1430 = vld [vmem:[%s9] sm:$0x7]
      %v1432 = vlaneseq
      %v1433 = vshrl.u32 %v1432, 7
      %v1434 = vsub.s32 0, %v1433
      %v1435 = vrot.slane %v1430, %v1434
      %v1436 = vlaneseq
      %v1437 = vshrl.u32 %v1436, 7
      %v1438 = vsub.s32 1, %v1437
      %v1439 = vrot.slane %v1430, %v1438
      %v1440 = vlaneseq
      %v1441 = vshrl.u32 %v1440, 7
      %v1442 = vsub.s32 2, %v1441
      %v1443 = vrot.slane %v1430, %v1442
      %v1447 = vadd.f32 %v1345, %v1435
      %v1448 = vadd.f32 %v1347, %v1439
      %v1449 = vadd.f32 %v1422, %v1443
      %v1450 = vadd.f32 %v1351, %v1435
      %v1451 = vadd.f32 %v1353, %v1439
      %v1452 = vadd.f32 %v1427, %v1443
      %v1453 = vmax.f32 %v1447, 0.0
      %v1454 = vmax.f32 %v1448, 0.0
      %v1455 = vmax.f32 %v1449, 0.0
      %v1456 = vmax.f32 %v1450, 0.0
      %v1457 = vmax.f32 %v1451, 0.0
      %v1458 = vmax.f32 %v1452, 0.0
      %1459 = vst [vmem:[%s359] sm:$0xff] %v1453
      %1460 = vst [vmem:[%s359 + $0x8] sm:$0xff] %v1454
      %vm1461 = vcmask 195584
      %1462 = vst.msk [vmem:[%s359 + $0x10] sm:$0xff] %vm1461, %v1455
      %1463 = vst [vmem:[%s359 + $0x18] sm:$0x3f] %v1456
      %1464 = vst [vmem:[%s359 + $0x20] sm:$0x3f] %v1457
      %vm1465 = vcmask 193536
      %1466 = vst.msk [vmem:[%s359 + $0x28] sm:$0x3f] %vm1465, %v1458
      %p1467 = scmp.lt.s32.totalorder %s21, 1
      %s1468 = scalar_select %p1467, %s21, 1
      %s1469 = smul.addr %s1468, 6
      %s1470 = smul.addr %s1469, 8
      %s1471 = scalar_lea.vmem %s10, %s1470
      // Predicated region
      $region61: #{inception_m_pallas.1} parent=59 // pred_check
        %p1472 = pneg %p254
      $region62: #{inception_m_pallas.1} parent=59 // pred_check_branch
        %1474 = sbr.rel (%p1472) target = $region64
      $region63: #{inception_m_pallas.1} parent=59 // pred_region
        _
      $region64: #{inception_m_pallas.1} parent=59 // pred_fallthru
        _
    $region60: #{inception_m_pallas.1} parent=5 // pred_fallthru
      _
    %p1475 = scmp.le.s32.totalorder 2, %s16
    // Predicated region
    $region65: #{inception_m_pallas.1} parent=5 // pred_check
      %p1476 = pneg %p1475
    $region66: #{inception_m_pallas.1} parent=5 // pred_check_branch
      %1478 = sbr.rel (%p1476) target = $region68
    $region67: #{inception_m_pallas.1} parent=5 // pred_region
      %s1479 = ssub.s32 %s16, 2
      // Predicated region
      $region69: #{inception_m_pallas.1} parent=67 // pred_check
        %p1480 = pneg %p260
      $region70: #{inception_m_pallas.1} parent=67 // pred_check_branch
        %1482 = sbr.rel (%p1480) target = $region72
      $region71: #{inception_m_pallas.1} parent=67 // pred_region
        %p1483 = scmp.lt.s32.totalorder %s22, 1
        %s1484 = scalar_select %p1483, %s22, 1
        %s1485 = smul.addr %s1484, 6
        %s1486 = smul.addr %s1485, 8
        %s1487 = scalar_lea.vmem %s10, %s1486
      $region72: #{inception_m_pallas.1} parent=67 // pred_fallthru
        _
    $region68: #{inception_m_pallas.1} parent=5 // pred_fallthru
      _
  $region6: #{inception_m_pallas.1} parent=0 // loop_footer
    %s20 = sadd.s32 1, %s16
  $region7: #{inception_m_pallas.1} parent=0 // loop_footer_branch
    %15 = sbr.rel target = $region3
  $region8: #{inception_m_pallas.1} parent=0 // loop_exit
    _

</llo_original>
